<compile_context>
chip_gen: v5e
topology: v5e:2x2
jax: 0.10.0
libtpu: 0.0.40
codegen_flags: <defaults>
</compile_context>

<pallas_src>
import functools

import jax
import jax.numpy as jnp
from jax.experimental import pallas as pl
from jax.experimental.pallas import tpu as pltpu


def _round_up(x, m):
    return ((x + m - 1) // m) * m


def _conv_rowtap_kernel(xm_ref, xh_ref, w_ref, b_ref, o_ref, acc_ref, *,
                        k, wcols, tm, apply_relu):
    """One (batch, row-tile) grid step of the row-tap convolution.

    xm_ref : (tm,  Kc)        main tile of the width-expanded image (compute dtype)
    xh_ref : (halo, Kc)       first `halo` rows of the *next* tile (compute dtype)
    w_ref  : (k, Kc, Cout_p)  per-row-tap weights, Kc = k*Cin (compute dtype)
    b_ref  : (1, Cout_p)      bias, f32
    o_ref  : (tm, Cout_p)     output tile (lane dense)
    acc_ref: (tm, Cout_p)     f32 accumulator scratch
    """
    # Row tap dy = 0: initialise the accumulator with the dot plus the bias
    # (single store; no zeros init, no trailing bias add).
    acc_ref[...] = jnp.dot(xm_ref[...], w_ref[0],
                           preferred_element_type=jnp.float32) + b_ref[...]

    # Remaining row taps: shifted, sublane-aligned slices (d = dy*wcols, 8 | d).
    # Rows that fall past the main tile come from the halo block (= the first
    # rows of the next tile), so each tap is at most two MXU dots.
    for dy in range(1, k):
        d = dy * wcols
        if d < tm:
            acc_ref[:tm - d, :] += jnp.dot(xm_ref[d:, :], w_ref[dy],
                                           preferred_element_type=jnp.float32)
        acc_ref[tm - d:, :] += jnp.dot(xh_ref[:d, :], w_ref[dy],
                                       preferred_element_type=jnp.float32)

    out = acc_ref[...]
    if apply_relu:
        out = jnp.maximum(out, 0.0)
    o_ref[...] = out.astype(o_ref.dtype)


@functools.partial(jax.jit,
                   static_argnames=("kernel_size", "stride", "is_last", "tm",
                                    "compute_dtype"))
def conv_layer_forward(x_nchw, weight, bias, *, kernel_size, stride,
                       is_last=False, tm=512, compute_dtype=jnp.bfloat16):
    """Forward of ConvLayer: ReflectionPad2d(k//2) -> Conv2d(k, stride) -> ReLU (if not is_last).

    x_nchw : (N, Cin, H, W)
    weight : (Cout, Cin, k, k)   (PyTorch Conv2d layout)
    bias   : (Cout,)
    returns: (N, Cout, Ho, Wo)
    """
    N, Cin, H, W = x_nchw.shape
    Cout = weight.shape[0]
    k = int(kernel_size)
    s = int(stride)
    pad = k // 2
    if weight.shape[1] != Cin or weight.shape[2] != k or weight.shape[3] != k:
        raise ValueError(f"weight shape {weight.shape} inconsistent with input/kernel_size")
    if s < 1:
        raise ValueError("stride must be >= 1")
    if pad >= H or pad >= W:
        raise ValueError("reflection padding requires pad < H and pad < W")
    if tm < 8:
        raise ValueError("tm must be >= 8")

    out_dtype = x_nchw.dtype

    # ---- Wrapper prologue (XLA): reflect pad, NHWC, width-tap expansion. ----
    x_pad = jnp.pad(x_nchw, ((0, 0), (0, 0), (pad, pad), (pad, pad)), mode="reflect")
    Hp, Wp = H + 2 * pad, W + 2 * pad
    x_nhwc = jnp.transpose(x_pad, (0, 2, 3, 1))          # (N, Hp, Wp, Cin)

    # PyTorch Conv2d output geometry on the padded image (VALID).
    Ho = (Hp - k) // s + 1
    Wo = (Wp - k) // s + 1
    Ho1 = Hp - k + 1                                     # stride-1 rows computed in-kernel

    # Width expansion: bake the k width taps AND the column stride into the
    # channel dim.  x_wide[n, h, w, dx*Cin + c] = x_pad[n, h, s*w + dx, c].
    # Wcols (the flat row stride) is a multiple of 8 so every in-kernel tap
    # offset dy*Wcols is sublane aligned.
    Wcols = _round_up(Wo, 8)
    Wneed = s * (Wcols - 1) + k
    if Wneed > Wp:
        x_nhwc = jnp.pad(x_nhwc, ((0, 0), (0, 0), (0, Wneed - Wp), (0, 0)))
    cols = [x_nhwc[:, :, dx:dx + s * (Wcols - 1) + 1:s, :] for dx in range(k)]
    x_wide = jnp.stack(cols, axis=3)                     # (N, Hp, Wcols, k, Cin)
    Kc = k * Cin
    # Single bf16 cast here (no per-tap casts in the kernel; halves x HBM bytes).
    x_wide = x_wide.reshape(N, Hp * Wcols, Kc).astype(compute_dtype)

    # ---- Tiling geometry. ----
    M_valid = Ho1 * Wcols                                # flat positions we need
    halo = (k - 1) * Wcols if k > 1 else 8               # max row-tap offset (mult of 8)
    desired = max(8, min(tm, _round_up(M_valid, 8)))
    tm_eff = _round_up(desired, halo)                    # multiple of halo (and of 8)
    M_pad = _round_up(M_valid, tm_eff)
    n_tiles = M_pad // tm_eff
    hbpt = tm_eff // halo                                # halo blocks per tile
    L = M_pad + halo                                     # every (main+halo) read in bounds
    x_wide = jnp.pad(x_wide, ((0, 0), (0, L - Hp * Wcols), (0, 0)))

    # Weights as (k, k*Cin, Cout_p) row taps; Cout zero-padded so output stores
    # are lane dense (unmasked vst).  Bias stays f32.
    Cout_p = _round_up(max(Cout, 128), 128)
    w_taps = jnp.transpose(weight, (2, 3, 1, 0)).reshape(k, Kc, Cout)
    w_taps = jnp.pad(w_taps, ((0, 0), (0, 0), (0, Cout_p - Cout))).astype(compute_dtype)
    b_row = jnp.pad(bias.astype(jnp.float32), (0, Cout_p - Cout)).reshape(1, Cout_p)

    # ---- VMEM budget (lane/sublane-padded), with headroom; fits v7x 64 MiB. ----
    def _tile_bytes(rows, lanes, dt):
        return _round_up(max(rows, 1), 8) * _round_up(max(lanes, 1), 128) * jnp.dtype(dt).itemsize

    est = (2 * _tile_bytes(tm_eff, Kc, compute_dtype)            # main tile (double buffered)
           + 2 * _tile_bytes(halo, Kc, compute_dtype)            # halo block
           + 2 * _tile_bytes(tm_eff, Cout_p, out_dtype)          # output tile
           + 2 * k * _tile_bytes(Kc, Cout_p, compute_dtype)      # weights
           + _tile_bytes(1, Cout_p, jnp.float32)                 # bias
           + _tile_bytes(tm_eff, Cout_p, jnp.float32)            # f32 accumulator
           + (1 << 20))                                          # misc headroom
    vmem_limit = int(min(max(2 * est, 16 * 1024 * 1024), 48 * 1024 * 1024))

    grid = (N, n_tiles)
    kernel = functools.partial(_conv_rowtap_kernel, k=k, wcols=Wcols, tm=tm_eff,
                               apply_relu=not is_last)

    out_flat = pl.pallas_call(
        kernel,
        out_shape=jax.ShapeDtypeStruct((N, M_pad, Cout_p), out_dtype),
        grid_spec=pltpu.PrefetchScalarGridSpec(
            num_scalar_prefetch=0,
            grid=grid,
            in_specs=[
                # Main tile i of batch n (auto-pipelined / double buffered).
                pl.BlockSpec((None, tm_eff, Kc), lambda n, i: (n, i, 0)),
                # Halo = first `halo` rows of tile i+1 (same array, small block).
                pl.BlockSpec((None, halo, Kc), lambda n, i: (n, (i + 1) * hbpt, 0)),
                # Weights / bias: constant index_map -> fetched once, resident.
                pl.BlockSpec((k, Kc, Cout_p), lambda n, i: (0, 0, 0)),
                pl.BlockSpec((1, Cout_p), lambda n, i: (0, 0)),
            ],
            out_specs=pl.BlockSpec((None, tm_eff, Cout_p), lambda n, i: (n, i, 0)),
            scratch_shapes=[pltpu.VMEM((tm_eff, Cout_p), jnp.float32)],
        ),
        compiler_params=pltpu.CompilerParams(
            dimension_semantics=("parallel", "parallel"),
            vmem_limit_bytes=vmem_limit),
    )(x_wide, x_wide, w_taps, b_row)

    # ---- Epilogue: drop row/lane padding, subsample strided rows, back to NCHW.
    out = out_flat[:, :M_valid, :Cout].reshape(N, Ho1, Wcols, Cout)[:, :, :Wo, :]
    if s > 1:
        out = out[:, ::s, :, :]
    return jnp.transpose(out, (0, 3, 1, 2)).astype(out_dtype)


def _reference_conv_layer(x, weight, bias, kernel_size, stride, is_last,
                          cast_dtype=None):
    """Pure-JAX reference (reflection pad + conv + optional relu)."""
    if cast_dtype is not None:
        x = x.astype(cast_dtype).astype(jnp.float32)
        weight = weight.astype(cast_dtype).astype(jnp.float32)
    pad = kernel_size // 2
    xp = jnp.pad(x, ((0, 0), (0, 0), (pad, pad), (pad, pad)), mode="reflect")
    out = jax.lax.conv_general_dilated(
        xp, weight, window_strides=(stride, stride), padding="VALID",
        dimension_numbers=("NCHW", "OIHW", "NCHW"),
        precision=jax.lax.Precision.HIGHEST)
    out = out + bias.reshape(1, -1, 1, 1).astype(jnp.float32)
    if not is_last:
        out = jax.nn.relu(out)
    return out


if __name__ == "__main__":
    key = jax.random.PRNGKey(0)
    k_x, k_w, k_b = jax.random.split(key, 3)

    N, Cin, H, W = 2, 4, 16, 16
    Cout, ksize = 8, 3

    x = jax.random.normal(k_x, (N, Cin, H, W), dtype=jnp.float32)
    # Deterministic init mimicking Conv2d's uniform(-bound, bound), bound = 1/sqrt(fan_in).
    fan_in = Cin * ksize * ksize
    bound = 1.0 / (fan_in ** 0.5)
    weight = jax.random.uniform(k_w, (Cout, Cin, ksize, ksize), jnp.float32, -bound, bound)
    bias = jax.random.uniform(k_b, (Cout,), jnp.float32, -bound, bound)

    # 1) f32 compute path, stride=1, with ReLU: tight check.
    out_f32 = jax.block_until_ready(
        conv_layer_forward(x, weight, bias, kernel_size=ksize, stride=1,
                           is_last=False, compute_dtype=jnp.float32))
    ref = _reference_conv_layer(x, weight, bias, ksize, 1, False)
    assert out_f32.shape == (N, Cout, H, W), out_f32.shape
    assert jnp.allclose(out_f32, ref, atol=1e-4, rtol=1e-4), \
        float(jnp.max(jnp.abs(out_f32 - ref)))

    # 2) default bf16 MXU path, stride=1, with ReLU: compare against a
    #    bf16-input / f32-accumulation reference (tight check).
    out_bf = jax.block_until_ready(
        conv_layer_forward(x, weight, bias, kernel_size=ksize, stride=1))
    ref_bf = _reference_conv_layer(x, weight, bias, ksize, 1, False,
                                   cast_dtype=jnp.bfloat16)
    assert out_bf.shape == (N, Cout, H, W), out_bf.shape
    assert jnp.allclose(out_bf, ref_bf, atol=1e-3, rtol=1e-3), \
        float(jnp.max(jnp.abs(out_bf - ref_bf)))

    # 3) stride=2, is_last=True (no ReLU), f32 compute: tight check.
    out_s2 = jax.block_until_ready(
        conv_layer_forward(x, weight, bias, kernel_size=ksize, stride=2,
                           is_last=True, compute_dtype=jnp.float32))
    ref_s2 = _reference_conv_layer(x, weight, bias, ksize, 2, True)
    assert out_s2.shape == ref_s2.shape == (N, Cout, 8, 8), out_s2.shape
    assert jnp.allclose(out_s2, ref_s2, atol=1e-4, rtol=1e-4), \
        float(jnp.max(jnp.abs(out_s2 - ref_s2)))

    print("KERNEL_OK")
</pallas_src>

<mosaic_0001>
module attributes {stable_mosaic.version = 11 : i64} {
  func.func @_conv_rowtap_kernel(%arg0: i32, %arg1: i32, %arg2: memref<1x256x12xf32, #tpu.memory_space<vmem>>, %arg3: memref<1x32x12xf32, #tpu.memory_space<vmem>>, %arg4: memref<3x12x128xf32, #tpu.memory_space<vmem>>, %arg5: memref<1x128xf32, #tpu.memory_space<vmem>>, %arg6: memref<1x256x128xf32, #tpu.memory_space<vmem>>, %arg7: memref<256x128xf32, #tpu.memory_space<vmem>>) attributes {dimension_semantics = [#tpu.dimension_semantics<parallel>, #tpu.dimension_semantics<parallel>], iteration_bounds = array<i64: 2, 1>, scalar_prefetch = 0 : i64, scratch_operands = 1 : i64, tpu.core_type = #tpu.core_type<tc>, window_params = [{transform_indices = @transform_0, window_bounds = array<i64: 1, 256, 12>}, {transform_indices = @transform_1, window_bounds = array<i64: 1, 32, 12>}, {pipeline_mode = #tpu.pipeline_mode<synchronous>, transform_indices = @transform_2, window_bounds = array<i64: 3, 12, 128>}, {pipeline_mode = #tpu.pipeline_mode<synchronous>, transform_indices = @transform_3, window_bounds = array<i64: 1, 128>}, {transform_indices = @transform_4, window_bounds = array<i64: 1, 256, 128>}]} {
    %c0 = arith.constant 0 : index
    %c0_0 = arith.constant 0 : index
    %c0_1 = arith.constant 0 : index
    %0 = vector.load %arg2[%c0, %c0_0, %c0_1] : memref<1x256x12xf32, #tpu.memory_space<vmem>>, vector<1x256x12xf32>
    %1 = vector.shape_cast %0 : vector<1x256x12xf32> to vector<256x12xf32>
    %c0_2 = arith.constant 0 : index
    %c0_3 = arith.constant 0 : index
    %c0_4 = arith.constant 0 : index
    %2 = vector.load %arg4[%c0_2, %c0_3, %c0_4] : memref<3x12x128xf32, #tpu.memory_space<vmem>>, vector<1x12x128xf32>
    %3 = vector.shape_cast %2 : vector<1x12x128xf32> to vector<12x128xf32>
    %cst = arith.constant dense<0.000000e+00> : vector<256x128xf32>
    %4 = tpu.matmul %1, %3, %cst {dimension_numbers = #tpu.dot_dimension_numbers<[1], [0], [0], [1], [0, 0, 1, 1], [], []>} : vector<256x12xf32>, vector<12x128xf32>, vector<256x128xf32> -> vector<256x128xf32>
    %c0_5 = arith.constant 0 : index
    %c0_6 = arith.constant 0 : index
    %5 = vector.load %arg5[%c0_5, %c0_6] : memref<1x128xf32, #tpu.memory_space<vmem>>, vector<1x128xf32>
    %6 = vector.broadcast %5 : vector<1x128xf32> to vector<256x128xf32>
    %7 = arith.addf %4, %6 : vector<256x128xf32>
    %c0_7 = arith.constant 0 : index
    %c0_8 = arith.constant 0 : index
    %8 = vector.load %arg7[%c0_7, %c0_8] : memref<256x128xf32, #tpu.memory_space<vmem>>, vector<256x128xf32>
    tpu.vector_store %arg7[%c0_7, %c0_8], %7 {strides = array<i32>} : memref<256x128xf32, #tpu.memory_space<vmem>>, vector<256x128xf32>,
    %c0_9 = arith.constant 0 : index
    %c0_10 = arith.constant 0 : index
    %9 = vector.load %arg7[%c0_9, %c0_10] : memref<256x128xf32, #tpu.memory_space<vmem>>, vector<240x128xf32>
    %c0_11 = arith.constant 0 : index
    %c16 = arith.constant 16 : index
    %c0_12 = arith.constant 0 : index
    %10 = vector.load %arg2[%c0_11, %c16, %c0_12] : memref<1x256x12xf32, #tpu.memory_space<vmem>>, vector<1x240x12xf32>
    %11 = vector.shape_cast %10 : vector<1x240x12xf32> to vector<240x12xf32>
    %c1 = arith.constant 1 : index
    %c0_13 = arith.constant 0 : index
    %c0_14 = arith.constant 0 : index
    %12 = vector.load %arg4[%c1, %c0_13, %c0_14] : memref<3x12x128xf32, #tpu.memory_space<vmem>>, vector<1x12x128xf32>
    %13 = vector.shape_cast %12 : vector<1x12x128xf32> to vector<12x128xf32>
    %cst_15 = arith.constant dense<0.000000e+00> : vector<240x128xf32>
    %14 = tpu.matmul %11, %13, %cst_15 {dimension_numbers = #tpu.dot_dimension_numbers<[1], [0], [0], [1], [0, 0, 1, 1], [], []>} : vector<240x12xf32>, vector<12x128xf32>, vector<240x128xf32> -> vector<240x128xf32>
    %15 = arith.addf %9, %14 : vector<240x128xf32>
    %c0_16 = arith.constant 0 : index
    %c0_17 = arith.constant 0 : index
    %16 = vector.load %arg7[%c0_16, %c0_17] : memref<256x128xf32, #tpu.memory_space<vmem>>, vector<240x128xf32>
    tpu.vector_store %arg7[%c0_16, %c0_17], %15 {strides = array<i32>} : memref<256x128xf32, #tpu.memory_space<vmem>>, vector<240x128xf32>,
    %c240 = arith.constant 240 : index
    %c0_18 = arith.constant 0 : index
    %17 = vector.load %arg7[%c240, %c0_18] : memref<256x128xf32, #tpu.memory_space<vmem>>, vector<16x128xf32>
    %c0_19 = arith.constant 0 : index
    %c0_20 = arith.constant 0 : index
    %c0_21 = arith.constant 0 : index
    %18 = vector.load %arg3[%c0_19, %c0_20, %c0_21] : memref<1x32x12xf32, #tpu.memory_space<vmem>>, vector<1x16x12xf32>
    %19 = vector.shape_cast %18 : vector<1x16x12xf32> to vector<16x12xf32>
    %c1_22 = arith.constant 1 : index
    %c0_23 = arith.constant 0 : index
    %c0_24 = arith.constant 0 : index
    %20 = vector.load %arg4[%c1_22, %c0_23, %c0_24] : memref<3x12x128xf32, #tpu.memory_space<vmem>>, vector<1x12x128xf32>
    %21 = vector.shape_cast %20 : vector<1x12x128xf32> to vector<12x128xf32>
    %cst_25 = arith.constant dense<0.000000e+00> : vector<16x128xf32>
    %22 = tpu.matmul %19, %21, %cst_25 {dimension_numbers = #tpu.dot_dimension_numbers<[1], [0], [0], [1], [0, 0, 1, 1], [], []>} : vector<16x12xf32>, vector<12x128xf32>, vector<16x128xf32> -> vector<16x128xf32>
    %23 = arith.addf %17, %22 : vector<16x128xf32>
    %c240_26 = arith.constant 240 : index
    %c0_27 = arith.constant 0 : index
    %24 = vector.load %arg7[%c240_26, %c0_27] : memref<256x128xf32, #tpu.memory_space<vmem>>, vector<16x128xf32>
    tpu.vector_store %arg7[%c240_26, %c0_27], %23 {strides = array<i32>} : memref<256x128xf32, #tpu.memory_space<vmem>>, vector<16x128xf32>,
    %c0_28 = arith.constant 0 : index
    %c0_29 = arith.constant 0 : index
    %25 = vector.load %arg7[%c0_28, %c0_29] : memref<256x128xf32, #tpu.memory_space<vmem>>, vector<224x128xf32>
    %c0_30 = arith.constant 0 : index
    %c32 = arith.constant 32 : index
    %c0_31 = arith.constant 0 : index
    %26 = vector.load %arg2[%c0_30, %c32, %c0_31] : memref<1x256x12xf32, #tpu.memory_space<vmem>>, vector<1x224x12xf32>
    %27 = vector.shape_cast %26 : vector<1x224x12xf32> to vector<224x12xf32>
    %c2 = arith.constant 2 : index
    %c0_32 = arith.constant 0 : index
    %c0_33 = arith.constant 0 : index
    %28 = vector.load %arg4[%c2, %c0_32, %c0_33] : memref<3x12x128xf32, #tpu.memory_space<vmem>>, vector<1x12x128xf32>
    %29 = vector.shape_cast %28 : vector<1x12x128xf32> to vector<12x128xf32>
    %cst_34 = arith.constant dense<0.000000e+00> : vector<224x128xf32>
    %30 = tpu.matmul %27, %29, %cst_34 {dimension_numbers = #tpu.dot_dimension_numbers<[1], [0], [0], [1], [0, 0, 1, 1], [], []>} : vector<224x12xf32>, vector<12x128xf32>, vector<224x128xf32> -> vector<224x128xf32>
    %31 = arith.addf %25, %30 : vector<224x128xf32>
    %c0_35 = arith.constant 0 : index
    %c0_36 = arith.constant 0 : index
    %32 = vector.load %arg7[%c0_35, %c0_36] : memref<256x128xf32, #tpu.memory_space<vmem>>, vector<224x128xf32>
    tpu.vector_store %arg7[%c0_35, %c0_36], %31 {strides = array<i32>} : memref<256x128xf32, #tpu.memory_space<vmem>>, vector<224x128xf32>,
    %c224 = arith.constant 224 : index
    %c0_37 = arith.constant 0 : index
    %33 = vector.load %arg7[%c224, %c0_37] : memref<256x128xf32, #tpu.memory_space<vmem>>, vector<32x128xf32>
    %c0_38 = arith.constant 0 : index
    %c0_39 = arith.constant 0 : index
    %c0_40 = arith.constant 0 : index
    %34 = vector.load %arg3[%c0_38, %c0_39, %c0_40] : memref<1x32x12xf32, #tpu.memory_space<vmem>>, vector<1x32x12xf32>
    %35 = vector.shape_cast %34 : vector<1x32x12xf32> to vector<32x12xf32>
    %c2_41 = arith.constant 2 : index
    %c0_42 = arith.constant 0 : index
    %c0_43 = arith.constant 0 : index
    %36 = vector.load %arg4[%c2_41, %c0_42, %c0_43] : memref<3x12x128xf32, #tpu.memory_space<vmem>>, vector<1x12x128xf32>
    %37 = vector.shape_cast %36 : vector<1x12x128xf32> to vector<12x128xf32>
    %cst_44 = arith.constant dense<0.000000e+00> : vector<32x128xf32>
    %38 = tpu.matmul %35, %37, %cst_44 {dimension_numbers = #tpu.dot_dimension_numbers<[1], [0], [0], [1], [0, 0, 1, 1], [], []>} : vector<32x12xf32>, vector<12x128xf32>, vector<32x128xf32> -> vector<32x128xf32>
    %39 = arith.addf %33, %38 : vector<32x128xf32>
    %c224_45 = arith.constant 224 : index
    %c0_46 = arith.constant 0 : index
    %40 = vector.load %arg7[%c224_45, %c0_46] : memref<256x128xf32, #tpu.memory_space<vmem>>, vector<32x128xf32>
    tpu.vector_store %arg7[%c224_45, %c0_46], %39 {strides = array<i32>} : memref<256x128xf32, #tpu.memory_space<vmem>>, vector<32x128xf32>,
    %c0_47 = arith.constant 0 : index
    %c0_48 = arith.constant 0 : index
    %41 = vector.load %arg7[%c0_47, %c0_48] : memref<256x128xf32, #tpu.memory_space<vmem>>, vector<256x128xf32>
    %cst_49 = arith.constant 0.000000e+00 : f32
    %42 = vector.broadcast %cst_49 : f32 to vector<256x128xf32>
    %43 = arith.maximumf %41, %42 : vector<256x128xf32>
    %c0_50 = arith.constant 0 : index
    %c0_51 = arith.constant 0 : index
    %c0_52 = arith.constant 0 : index
    %44 = vector.load %arg6[%c0_50, %c0_51, %c0_52] : memref<1x256x128xf32, #tpu.memory_space<vmem>>, vector<1x256x128xf32>
    %45 = vector.shape_cast %44 : vector<1x256x128xf32> to vector<256x128xf32>
    %46 = vector.shape_cast %43 : vector<256x128xf32> to vector<1x256x128xf32>
    tpu.vector_store %arg6[%c0_50, %c0_51, %c0_52], %46 {strides = array<i32>} : memref<1x256x128xf32, #tpu.memory_space<vmem>>, vector<1x256x128xf32>,
    return
  }
  func.func @transform_0(%arg0: i32, %arg1: i32) -> (i32, i32, i32) {
    %c0_i32 = arith.constant 0 : i32
    %c0_i32_0 = arith.constant 0 : i32
    return %arg0, %arg1, %c0_i32 : i32, i32, i32
  }
  func.func @transform_1(%arg0: i32, %arg1: i32) -> (i32, i32, i32) {
    %c1_i32 = arith.constant 1 : i32
    %0 = arith.addi %arg1, %c1_i32 : i32
    %c8_i32 = arith.constant 8 : i32
    %1 = arith.muli %0, %c8_i32 : i32
    %c0_i32 = arith.constant 0 : i32
    %c0_i32_0 = arith.constant 0 : i32
    return %arg0, %1, %c0_i32 : i32, i32, i32
  }
  func.func @transform_2(%arg0: i32, %arg1: i32) -> (i32, i32, i32) {
    %c0_i32 = arith.constant 0 : i32
    %c0_i32_0 = arith.constant 0 : i32
    %c0_i32_1 = arith.constant 0 : i32
    %c0_i32_2 = arith.constant 0 : i32
    return %c0_i32, %c0_i32_0, %c0_i32_1 : i32, i32, i32
  }
  func.func @transform_3(%arg0: i32, %arg1: i32) -> (i32, i32) {
    %c0_i32 = arith.constant 0 : i32
    %c0_i32_0 = arith.constant 0 : i32
    %c0_i32_1 = arith.constant 0 : i32
    return %c0_i32, %c0_i32_0 : i32, i32
  }
  func.func @transform_4(%arg0: i32, %arg1: i32) -> (i32, i32, i32) {
    %c0_i32 = arith.constant 0 : i32
    %c0_i32_0 = arith.constant 0 : i32
    return %arg0, %arg1, %c0_i32 : i32, i32, i32
  }
}

</mosaic_0001>

<llo_original>
// kernel: conv_layer_forward.1
$region0: #{conv_layer_forward.1}
  #allocation0 [shape = 'u32[]', space=smem, size = 0x4, offset = 0x4, fixed_abs, tag = 'smem constant byte address 0x4 - core index']
  #allocation1 [shape = 'u32[72,128]{1,0:T(1,128)}', space=vmem, size = 0x9000, scoped, tag = 'internal scratch']
  #allocation2 [shape = 'f32[256,128]{1,0:T(8,128)}', space=vmem, size = 0x20000, scoped, tag = 'scratch operand']
  %s0 = inlined_call_operand.vmem [shape: f32[2,288,12], index: 0, kind: input, shape index: {}, may-alias: {0,1}]
  %s1 = inlined_call_operand.vmem [shape: f32[2,288,12], index: 1, kind: input, shape index: {}, may-alias: {0,1}]
  %s2 = inlined_call_operand.vmem [shape: f32[3,12,128], index: 2, kind: input, shape index: {}]
  %s3 = inlined_call_operand.vmem [shape: f32[1,128], index: 3, kind: input, shape index: {}]
  %s4 = inlined_call_operand.vmem [shape: f32[2,256,128], index: 4, kind: output, shape index: {}]
  %s5 = sld [smem:[#allocation0]]
  $region49: #{conv_layer_forward.1} parent=0
    _
  %s7 = ssub.s32 1, %s5
  %s8 = scalar_select 0, %s7, %s5
  loop: start=0, step=1, limit=4
  $region2: #{conv_layer_forward.1} parent=0 // loop_pre_header
    _
  $region3: #{conv_layer_forward.1} parent=0 // loop_header
    %s10 = sphi 0, %s14
    %p11 = scmp.ge.s32.totalorder %s10, 4
    %s17 = sphi 0, %s29
    %s18 = sphi 0, %s25
    %s19 = sphi 0, %s17
    %s20 = sphi 0, %s18
    %s21 = sphi 0, %s19
    %s22 = sphi 0, %s20
    %s34 = sphi 0, %s36
    %s37 = sphi 0, %s34
    %s38 = sphi 0, %s37
    %s54 = sphi 0, %s38
    %s66 = sphi 0, %s68
    %s69 = sphi 0, %s66
    %s70 = sphi 0, %s69
    %s86 = sphi 0, %s70
    %s90 = sphi 0, %s90
    %s92 = sphi 0, %s90
    %s93 = sphi 0, %s92
    %s107 = sphi 0, %s93
    %s111 = sphi 0, %s111
    %s113 = sphi 0, %s111
    %s114 = sphi 0, %s113
    %s128 = sphi 0, %s114
    %s136 = sphi 0, %s138
    %s139 = sphi 0, %s136
    %s140 = sphi 0, %s139
    %s156 = sphi 0, %s140
  $region4: #{conv_layer_forward.1} parent=0 // loop_header_branch
    %13 = sbr.rel (%p11) target = $region8
  $region5: #{conv_layer_forward.1} parent=0 // loop_body
    %s15 = ssub.s32 %s10, 1
    %s16 = ssub.s32 %s10, 2
    %s23 = sadd.s32 1, %s18
    %p24 = scmp.ge.s32.totalorder %s23, 1
    %s25 = scalar_select %p24, 0, %s23
    %s26 = sadd.s32 1, %s17
    %s27 = scalar_select %p24, %s26, %s17
    %p28 = scmp.ge.s32.totalorder %s27, 2
    %s29 = scalar_select %p28, 0, %s27
    %s30 = ssub.s32 %s17, %s29
    %s31 = ssub.s32 %s18, %s25
    %s32 = sor.u32 %s30, %s31
    %p33 = scmp.eq.s32.totalorder %s32, 0
    %s35 = sadd.s32 %s34, 1
    %s36 = scalar_select %p33, %s34, %s35
    %p39 = pneg %p33
    %p40 = scmp.eq.s32.totalorder %s10, 1
    %p41 = por %p39, %p40
    %p42 = scmp.ne.s32.totalorder %s34, %s37
    %p43 = scmp.eq.s32.totalorder %s10, 0
    %p44 = por %p42, %p43
    %p45 = scmp.ne.s32.totalorder %s34, %s37
    %p46 = scmp.eq.s32.totalorder %s15, 1
    %p47 = por %p45, %p46
    %p48 = scmp.ne.s32.totalorder %s37, %s38
    %p49 = scmp.eq.s32.totalorder %s15, 0
    %p50 = por %p48, %p49
    %p51 = scmp.ne.s32.totalorder %s37, %s38
    %p52 = scmp.eq.s32.totalorder %s16, 1
    %p53 = por %p51, %p52
    %p55 = scmp.ne.s32.totalorder %s38, %s54
    %p56 = scmp.eq.s32.totalorder %s16, 0
    %p57 = por %p55, %p56
    %s58 = sadd.s32 %s18, 1
    %s59 = smul.u32 %s58, 8
    %s60 = sadd.s32 %s25, 1
    %s61 = smul.u32 %s60, 8
    %s62 = ssub.s32 %s17, %s29
    %s63 = ssub.s32 %s59, %s61
    %s64 = sor.u32 %s62, %s63
    %p65 = scmp.eq.s32.totalorder %s64, 0
    %s67 = sadd.s32 %s66, 1
    %s68 = scalar_select %p65, %s66, %s67
    %p71 = pneg %p65
    %p72 = scmp.eq.s32.totalorder %s10, 1
    %p73 = por %p71, %p72
    %p74 = scmp.ne.s32.totalorder %s66, %s69
    %p75 = scmp.eq.s32.totalorder %s10, 0
    %p76 = por %p74, %p75
    %p77 = scmp.ne.s32.totalorder %s66, %s69
    %p78 = scmp.eq.s32.totalorder %s15, 1
    %p79 = por %p77, %p78
    %p80 = scmp.ne.s32.totalorder %s69, %s70
    %p81 = scmp.eq.s32.totalorder %s15, 0
    %p82 = por %p80, %p81
    %p83 = scmp.ne.s32.totalorder %s69, %s70
    %p84 = scmp.eq.s32.totalorder %s16, 1
    %p85 = por %p83, %p84
    %p87 = scmp.ne.s32.totalorder %s70, %s86
    %p88 = scmp.eq.s32.totalorder %s16, 0
    %p89 = por %p87, %p88
    %s91 = sadd.s32 %s90, 1
    %p94 = scmp.eq.s32.totalorder %s10, 1
    %p95 = scmp.ne.s32.totalorder %s90, %s92
    %p96 = scmp.eq.s32.totalorder %s10, 0
    %p97 = por %p95, %p96
    %p98 = scmp.ne.s32.totalorder %s90, %s92
    %p99 = scmp.eq.s32.totalorder %s15, 1
    %p100 = por %p98, %p99
    %p101 = scmp.ne.s32.totalorder %s92, %s93
    %p102 = scmp.eq.s32.totalorder %s15, 0
    %p103 = por %p101, %p102
    %p104 = scmp.ne.s32.totalorder %s92, %s93
    %p105 = scmp.eq.s32.totalorder %s16, 1
    %p106 = por %p104, %p105
    %p108 = scmp.ne.s32.totalorder %s93, %s107
    %p109 = scmp.eq.s32.totalorder %s16, 0
    %p110 = por %p108, %p109
    %s112 = sadd.s32 %s111, 1
    %p115 = scmp.eq.s32.totalorder %s10, 1
    %p116 = scmp.ne.s32.totalorder %s111, %s113
    %p117 = scmp.eq.s32.totalorder %s10, 0
    %p118 = por %p116, %p117
    %p119 = scmp.ne.s32.totalorder %s111, %s113
    %p120 = scmp.eq.s32.totalorder %s15, 1
    %p121 = por %p119, %p120
    %p122 = scmp.ne.s32.totalorder %s113, %s114
    %p123 = scmp.eq.s32.totalorder %s15, 0
    %p124 = por %p122, %p123
    %p125 = scmp.ne.s32.totalorder %s113, %s114
    %p126 = scmp.eq.s32.totalorder %s16, 1
    %p127 = por %p125, %p126
    %p129 = scmp.ne.s32.totalorder %s114, %s128
    %p130 = scmp.eq.s32.totalorder %s16, 0
    %p131 = por %p129, %p130
    %s132 = ssub.s32 %s17, %s29
    %s133 = ssub.s32 %s18, %s25
    %s134 = sor.u32 %s132, %s133
    %p135 = scmp.eq.s32.totalorder %s134, 0
    %s137 = sadd.s32 %s136, 1
    %s138 = scalar_select %p135, %s136, %s137
    %p141 = pneg %p135
    %p142 = scmp.eq.s32.totalorder %s10, 1
    %p143 = por %p141, %p142
    %p144 = scmp.ne.s32.totalorder %s136, %s139
    %p145 = scmp.eq.s32.totalorder %s10, 0
    %p146 = por %p144, %p145
    %p147 = scmp.ne.s32.totalorder %s136, %s139
    %p148 = scmp.eq.s32.totalorder %s15, 1
    %p149 = por %p147, %p148
    %p150 = scmp.ne.s32.totalorder %s139, %s140
    %p151 = scmp.eq.s32.totalorder %s15, 0
    %p152 = por %p150, %p151
    %p153 = scmp.ne.s32.totalorder %s139, %s140
    %p154 = scmp.eq.s32.totalorder %s16, 1
    %p155 = por %p153, %p154
    %p157 = scmp.ne.s32.totalorder %s140, %s156
    %p158 = scmp.eq.s32.totalorder %s16, 0
    %p159 = por %p157, %p158
    %p160 = scmp.le.s32.totalorder 1, %s10
    %p161 = scmp.lt.s32.totalorder %s10, 3
    %p162 = pnand %p160, %p161
    %p163 = pneg %p162
    // Predicated region
    $region9: #{conv_layer_forward.1} parent=5 // pred_check
      _
    $region10: #{conv_layer_forward.1} parent=5 // pred_check_branch
      %165 = sbr.rel (%p162) target = $region12
    $region11: #{conv_layer_forward.1} parent=5 // pred_region
      %s166 = ssub.s32 %s10, 1
      // Predicated region
      $region13: #{conv_layer_forward.1} parent=11 // pred_check
        %p167 = pneg %p103
      $region14: #{conv_layer_forward.1} parent=11 // pred_check_branch
        %169 = sbr.rel (%p167) target = $region16
      $region15: #{conv_layer_forward.1} parent=11 // pred_region
        _
      $region16: #{conv_layer_forward.1} parent=11 // pred_fallthru
        _
      // Predicated region
      $region17: #{conv_layer_forward.1} parent=11 // pred_check
        %p170 = pneg %p124
      $region18: #{conv_layer_forward.1} parent=11 // pred_check_branch
        %172 = sbr.rel (%p170) target = $region20
      $region19: #{conv_layer_forward.1} parent=11 // pred_region
        _
      $region20: #{conv_layer_forward.1} parent=11 // pred_fallthru
        _
    $region12: #{conv_layer_forward.1} parent=5 // pred_fallthru
      _
    %p173 = scmp.lt.s32.totalorder %s10, 2
    // Predicated region
    $region21: #{conv_layer_forward.1} parent=5 // pred_check
      %p174 = pneg %p173
    $region22: #{conv_layer_forward.1} parent=5 // pred_check_branch
      %176 = sbr.rel (%p174) target = $region24
    $region23: #{conv_layer_forward.1} parent=5 // pred_region
      // Predicated region
      $region25: #{conv_layer_forward.1} parent=23 // pred_check
        %p177 = pneg %p44
      $region26: #{conv_layer_forward.1} parent=23 // pred_check_branch
        %179 = sbr.rel (%p177) target = $region28
      $region27: #{conv_layer_forward.1} parent=23 // pred_region
        %s180 = smul.u32 32, %s18
        %s181 = ssub.s32 36, %s180
        %p182 = scmp.lt.s32.totalorder %s181, 32
        %s183 = scalar_select %p182, %s181, 32
        %s184 = smul.u32 8, %s183
        %p185 = scmp.lt.s32.totalorder %s17, 1
        %s186 = scalar_select %p185, %s17, 1
        %p187 = scmp.lt.s32.totalorder %s180, 35
        %s188 = scalar_select %p187, %s180, 35
        %s189 = smul.addr %s186, 36
        %s190 = sadd.s32 %s188, %s189
        %s191 = smul.addr %s190, 8
        %s192 = scalar_lea.vmem %s0, %s191
        %s193 = smul.u32 32, %s18
        %s194 = ssub.s32 36, %s193
        %p195 = scmp.lt.s32.totalorder %s194, 32
        %s196 = scalar_select %p195, %s194, 32
        %s197 = smul.u32 8, %s196
      $region28: #{conv_layer_forward.1} parent=23 // pred_fallthru
        _
      // Predicated region
      $region29: #{conv_layer_forward.1} parent=23 // pred_check
        %p198 = pneg %p76
      $region30: #{conv_layer_forward.1} parent=23 // pred_check_branch
        %200 = sbr.rel (%p198) target = $region32
      $region31: #{conv_layer_forward.1} parent=23 // pred_region
        %s201 = sadd.s32 %s18, 1
        %s202 = smul.u32 %s201, 8
        %s203 = smul.u32 4, %s202
        %p204 = scmp.lt.s32.totalorder %s17, 1
        %s205 = scalar_select %p204, %s17, 1
        %p206 = scmp.lt.s32.totalorder %s203, 35
        %s207 = scalar_select %p206, %s203, 35
        %s208 = smul.addr %s205, 36
        %s209 = sadd.s32 %s207, %s208
        %s210 = smul.addr %s209, 8
        %s211 = scalar_lea.vmem %s1, %s210
        %s212 = sadd.s32 %s18, 1
        %s213 = smul.u32 %s212, 8
        %s214 = smul.u32 4, %s213
      $region32: #{conv_layer_forward.1} parent=23 // pred_fallthru
        _
    $region24: #{conv_layer_forward.1} parent=5 // pred_fallthru
      _
    %p215 = scmp.le.s32.totalorder 1, %s10
    %p216 = scmp.lt.s32.totalorder %s10, 3
    %p217 = pnand %p215, %p216
    %p218 = pneg %p217
    // Predicated region
    $region33: #{conv_layer_forward.1} parent=5 // pred_check
      _
    $region34: #{conv_layer_forward.1} parent=5 // pred_check_branch
      %220 = sbr.rel (%p217) target = $region36
    $region35: #{conv_layer_forward.1} parent=5 // pred_region
      %s221 = ssub.s32 %s10, 1
      %s222 = smul.u32 32, %s20
      %s223 = ssub.s32 36, %s222
      %p224 = scmp.lt.s32.totalorder %s223, 32
      %s225 = scalar_select %p224, %s223, 32
      %s226 = smul.u32 8, %s225
      %p227 = scmp.lt.s32.totalorder %s19, 1
      %s228 = scalar_select %p227, %s19, 1
      %p229 = scmp.lt.s32.totalorder %s222, 35
      %s230 = scalar_select %p229, %s222, 35
      %s231 = smul.addr %s228, 36
      %s232 = sadd.s32 %s230, %s231
      %s233 = smul.addr %s232, 8
      %s234 = scalar_lea.vmem %s0, %s233
      %p235 = pneg %p50
      %p236 = pneg %p47
      %s237 = sadd.s32 %s20, 1
      %s238 = smul.u32 %s237, 8
      %s239 = smul.u32 4, %s238
      %p240 = scmp.lt.s32.totalorder %s19, 1
      %s241 = scalar_select %p240, %s19, 1
      %p242 = scmp.lt.s32.totalorder %s239, 35
      %s243 = scalar_select %p242, %s239, 35
      %s244 = smul.addr %s241, 36
      %s245 = sadd.s32 %s243, %s244
      %s246 = smul.addr %s245, 8
      %s247 = scalar_lea.vmem %s1, %s246
      %p248 = pneg %p82
      %p249 = pneg %p79
      %p250 = pneg %p103
      %p251 = pneg %p100
      %p252 = pneg %p124
      %p253 = pneg %p121
      %p254 = pneg %p152
      %p255 = pneg %p149
      %s256 = smul.u32 32, %s20
      %p257 = scmp.lt.s32.totalorder %s19, 1
      %s258 = scalar_select %p257, %s19, 1
      %p259 = scmp.lt.s32.totalorder %s256, 31
      %s260 = scalar_select %p259, %s256, 31
      %s261 = smul.addr %s258, 32
      %s262 = sadd.s32 %s260, %s261
      %s263 = smul.addr %s262, 8
      %s264 = scalar_lea.vmem %s4, %s263
      %s265 = smul.u32 32, %s20
      %s266 = ssub.s32 36, %s265
      %p267 = scmp.lt.s32.totalorder %s266, 32
      %s268 = scalar_select %p267, %s266, 32
      %s269 = smul.u32 8, %s268
      %p270 = scmp.lt.s32.totalorder %s19, 1
      %s271 = scalar_select %p270, %s19, 1
      %p272 = scmp.lt.s32.totalorder %s265, 35
      %s273 = scalar_select %p272, %s265, 35
      %s274 = smul.addr %s271, 36
      %s275 = sadd.s32 %s273, %s274
      %s276 = smul.addr %s275, 8
      %s277 = scalar_lea.vmem %s0, %s276
      %s278 = smul.u32 32, %s20
      %s279 = ssub.s32 36, %s278
      %p280 = scmp.lt.s32.totalorder %s279, 32
      %s281 = scalar_select %p280, %s279, 32
      %s282 = smul.u32 8, %s281
      %s283 = sadd.s32 %s20, 1
      %s284 = smul.u32 %s283, 8
      %s285 = smul.u32 4, %s284
      %p286 = scmp.lt.s32.totalorder %s19, 1
      %s287 = scalar_select %p286, %s19, 1
      %p288 = scmp.lt.s32.totalorder %s285, 35
      %s289 = scalar_select %p288, %s285, 35
      %s290 = smul.addr %s287, 36
      %s291 = sadd.s32 %s289, %s290
      %s292 = smul.addr %s291, 8
      %s293 = scalar_lea.vmem %s1, %s292
      %s294 = sadd.s32 %s20, 1
      %s295 = smul.u32 %s294, 8
      %s296 = smul.u32 4, %s295
      %s297 = smul.u32 32, %s20
      %p298 = scmp.lt.s32.totalorder %s19, 1
      %s299 = scalar_select %p298, %s19, 1
      %p300 = scmp.lt.s32.totalorder %s297, 31
      %s301 = scalar_select %p300, %s297, 31
      %s302 = smul.addr %s299, 32
      %s303 = sadd.s32 %s301, %s302
      %s304 = smul.addr %s303, 8
      %s305 = scalar_lea.vmem %s4, %s304
      %s306 = smul.u32 32, %s20
      %v307 = vld [vmem:[%s277] sm:$0xff]
      %v308 = vld [vmem:[%s277 + $0x8] sm:$0xff]
      %v309 = vld [vmem:[%s277 + $0x10] sm:$0xff]
      %v310 = vld [vmem:[%s277 + $0x18] sm:$0xff]
      %v311 = vld [vmem:[%s277 + $0x20] sm:$0xff]
      %v312 = vld [vmem:[%s277 + $0x28] sm:$0xff]
      %v313 = vld [vmem:[%s277 + $0x30] sm:$0xff]
      %v314 = vld [vmem:[%s277 + $0x38] sm:$0xff]
      %v315 = vld [vmem:[%s277 + $0x40] sm:$0xff]
      %v316 = vld [vmem:[%s277 + $0x48] sm:$0xff]
      %v317 = vld [vmem:[%s277 + $0x50] sm:$0xff]
      %v318 = vld [vmem:[%s277 + $0x58] sm:$0xff]
      %v319 = vld [vmem:[%s277 + $0x60] sm:$0xff]
      %v320 = vld [vmem:[%s277 + $0x68] sm:$0xff]
      %v321 = vld [vmem:[%s277 + $0x70] sm:$0xff]
      %v322 = vld [vmem:[%s277 + $0x78] sm:$0xff]
      %v323 = vld [vmem:[%s277 + $0x80] sm:$0xff]
      %v324 = vld [vmem:[%s277 + $0x88] sm:$0xff]
      %v325 = vld [vmem:[%s277 + $0x90] sm:$0xff]
      %v326 = vld [vmem:[%s277 + $0x98] sm:$0xff]
      %v327 = vld [vmem:[%s277 + $0xa0] sm:$0xff]
      %v328 = vld [vmem:[%s277 + $0xa8] sm:$0xff]
      %v329 = vld [vmem:[%s277 + $0xb0] sm:$0xff]
      %v330 = vld [vmem:[%s277 + $0xb8] sm:$0xff]
      %v331 = vld [vmem:[%s277 + $0xc0] sm:$0xff]
      %v332 = vld [vmem:[%s277 + $0xc8] sm:$0xff]
      %v333 = vld [vmem:[%s277 + $0xd0] sm:$0xff]
      %v334 = vld [vmem:[%s277 + $0xd8] sm:$0xff]
      %v335 = vld [vmem:[%s277 + $0xe0] sm:$0xff]
      %v336 = vld [vmem:[%s277 + $0xe8] sm:$0xff]
      %v337 = vld [vmem:[%s277 + $0xf0] sm:$0xff]
      %v338 = vld [vmem:[%s277 + $0xf8] sm:$0xff]
      %v339 = vld [vmem:[%s2] sm:$0xff]
      %v340 = vld [vmem:[%s2 + $0x8] sm:$0xf]
      %v341 = vld [vmem:[%s3] sm:$0x1]
      %v343 = vperm.slane %v341, 0
      %vm345 = vcmask 97280
      %v347 = vsel %vm345, %v307, 0
      %v350 = vsel %vm345, %v308, 0
      %v353 = vsel %vm345, %v309, 0
      %v356 = vsel %vm345, %v310, 0
      %v359 = vsel %vm345, %v311, 0
      %v362 = vsel %vm345, %v312, 0
      %v365 = vsel %vm345, %v313, 0
      %v368 = vsel %vm345, %v314, 0
      %v371 = vsel %vm345, %v315, 0
      %v374 = vsel %vm345, %v316, 0
      %v377 = vsel %vm345, %v317, 0
      %v380 = vsel %vm345, %v318, 0
      %v383 = vsel %vm345, %v319, 0
      %v386 = vsel %vm345, %v320, 0
      %v389 = vsel %vm345, %v321, 0
      %v392 = vsel %vm345, %v322, 0
      %v395 = vsel %vm345, %v323, 0
      %v398 = vsel %vm345, %v324, 0
      %v401 = vsel %vm345, %v325, 0
      %v404 = vsel %vm345, %v326, 0
      %v407 = vsel %vm345, %v327, 0
      %v410 = vsel %vm345, %v328, 0
      %v413 = vsel %vm345, %v329, 0
      %v416 = vsel %vm345, %v330, 0
      %v419 = vsel %vm345, %v331, 0
      %v422 = vsel %vm345, %v332, 0
      %v425 = vsel %vm345, %v333, 0
      %v428 = vsel %vm345, %v334, 0
      %v431 = vsel %vm345, %v335, 0
      %v434 = vsel %vm345, %v336, 0
      %v437 = vsel %vm345, %v337, 0
      %v440 = vsel %vm345, %v338, 0
      %vm442 = vcmask 1043456
      %v444 = vsel %vm442, %v340, 0
      %446 = vmatpush.msra.mxu0 0.0
      %447 = vmatpush.msra.mxu0 0.0
      %448 = vmatpush.msra.mxu0 0.0
      %449 = vmatpush.msra.mxu0 0.0
      %450 = vmatpush.msra.mxu0 0.0
      %451 = vmatpush.msra.mxu0 0.0
      %452 = vmatpush.msra.mxu0 0.0
      %453 = vmatpush.msra.mxu0 0.0
      %454 = vmatpush.msra.mxu0 0.0
      %455 = vmatpush.msra.mxu0 0.0
      %456 = vmatpush.msra.mxu0 0.0
      %457 = vmatpush.msra.mxu0 0.0
      %458 = vmatpush.msra.mxu0 0.0
      %459 = vmatpush.msra.mxu0 0.0
      %460 = vmatpush.msra.mxu0 %v444
      %461 = vmatpush.msra.mxu0 %v339
      %462 = vmatmul.f32.gmra.mxu0 %v347
      %v463 = vpop.f32.mrf.mxu0
      %v464 = vadd.f32 %v343, %v463
      %465 = vmatmul.f32.gmra.mxu0 %v350
      %v466 = vpop.f32.mrf.mxu0
      %v467 = vadd.f32 %v343, %v466
      %468 = vmatmul.f32.gmra.mxu0 %v353
      %v469 = vpop.f32.mrf.mxu0
      %v470 = vadd.f32 %v343, %v469
      %471 = vmatmul.f32.gmra.mxu0 %v356
      %v472 = vpop.f32.mrf.mxu0
      %v473 = vadd.f32 %v343, %v472
      %474 = vmatmul.f32.gmra.mxu0 %v359
      %v475 = vpop.f32.mrf.mxu0
      %v476 = vadd.f32 %v343, %v475
      %477 = vmatmul.f32.gmra.mxu0 %v362
      %v478 = vpop.f32.mrf.mxu0
      %v479 = vadd.f32 %v343, %v478
      %480 = vmatmul.f32.gmra.mxu0 %v365
      %v481 = vpop.f32.mrf.mxu0
      %v482 = vadd.f32 %v343, %v481
      %483 = vmatmul.f32.gmra.mxu0 %v368
      %v484 = vpop.f32.mrf.mxu0
      %v485 = vadd.f32 %v343, %v484
      %486 = vmatmul.f32.gmra.mxu0 %v371
      %v487 = vpop.f32.mrf.mxu0
      %v488 = vadd.f32 %v343, %v487
      %489 = vmatmul.f32.gmra.mxu0 %v374
      %v490 = vpop.f32.mrf.mxu0
      %v491 = vadd.f32 %v343, %v490
      %492 = vmatmul.f32.gmra.mxu0 %v377
      %v493 = vpop.f32.mrf.mxu0
      %v494 = vadd.f32 %v343, %v493
      %495 = vmatmul.f32.gmra.mxu0 %v380
      %v496 = vpop.f32.mrf.mxu0
      %v497 = vadd.f32 %v343, %v496
      %498 = vmatmul.f32.gmra.mxu0 %v383
      %v499 = vpop.f32.mrf.mxu0
      %v500 = vadd.f32 %v343, %v499
      %501 = vmatmul.f32.gmra.mxu0 %v386
      %v502 = vpop.f32.mrf.mxu0
      %v503 = vadd.f32 %v343, %v502
      %504 = vmatmul.f32.gmra.mxu0 %v389
      %v505 = vpop.f32.mrf.mxu0
      %v506 = vadd.f32 %v343, %v505
      %507 = vmatmul.f32.gmra.mxu0 %v392
      %v508 = vpop.f32.mrf.mxu0
      %v509 = vadd.f32 %v343, %v508
      %510 = vmatmul.f32.gmra.mxu0 %v395
      %v511 = vpop.f32.mrf.mxu0
      %v512 = vadd.f32 %v343, %v511
      %513 = vmatmul.f32.gmra.mxu0 %v398
      %v514 = vpop.f32.mrf.mxu0
      %v515 = vadd.f32 %v343, %v514
      %516 = vmatmul.f32.gmra.mxu0 %v401
      %v517 = vpop.f32.mrf.mxu0
      %v518 = vadd.f32 %v343, %v517
      %519 = vmatmul.f32.gmra.mxu0 %v404
      %v520 = vpop.f32.mrf.mxu0
      %v521 = vadd.f32 %v343, %v520
      %522 = vmatmul.f32.gmra.mxu0 %v407
      %v523 = vpop.f32.mrf.mxu0
      %v524 = vadd.f32 %v343, %v523
      %525 = vmatmul.f32.gmra.mxu0 %v410
      %v526 = vpop.f32.mrf.mxu0
      %v527 = vadd.f32 %v343, %v526
      %528 = vmatmul.f32.gmra.mxu0 %v413
      %v529 = vpop.f32.mrf.mxu0
      %v530 = vadd.f32 %v343, %v529
      %531 = vmatmul.f32.gmra.mxu0 %v416
      %v532 = vpop.f32.mrf.mxu0
      %v533 = vadd.f32 %v343, %v532
      %534 = vmatmul.f32.gmra.mxu0 %v419
      %v535 = vpop.f32.mrf.mxu0
      %v536 = vadd.f32 %v343, %v535
      %537 = vmatmul.f32.gmra.mxu0 %v422
      %v538 = vpop.f32.mrf.mxu0
      %v539 = vadd.f32 %v343, %v538
      %540 = vmatmul.f32.gmra.mxu0 %v425
      %v541 = vpop.f32.mrf.mxu0
      %v542 = vadd.f32 %v343, %v541
      %543 = vmatmul.f32.gmra.mxu0 %v428
      %v544 = vpop.f32.mrf.mxu0
      %v545 = vadd.f32 %v343, %v544
      %546 = vmatmul.f32.gmra.mxu0 %v431
      %v547 = vpop.f32.mrf.mxu0
      %v548 = vadd.f32 %v343, %v547
      %549 = vmatmul.f32.gmra.mxu0 %v434
      %v550 = vpop.f32.mrf.mxu0
      %v551 = vadd.f32 %v343, %v550
      %552 = vmatmul.f32.gmra.mxu0 %v437
      %v553 = vpop.f32.mrf.mxu0
      %v554 = vadd.f32 %v343, %v553
      %555 = vmatmul.f32.gmra.mxu0 %v440
      %v556 = vpop.f32.mrf.mxu0
      %v557 = vadd.f32 %v343, %v556
      %558 = vdwg.mxu0
      %559 = vst [vmem:[#allocation2] sm:$0xff] %v464
      %560 = vst [vmem:[#allocation2 + $0x8] sm:$0xff] %v467
      %561 = vst [vmem:[#allocation2 + $0x10] sm:$0xff] %v470
      %562 = vst [vmem:[#allocation2 + $0x18] sm:$0xff] %v473
      %563 = vst [vmem:[#allocation2 + $0x20] sm:$0xff] %v476
      %564 = vst [vmem:[#allocation2 + $0x28] sm:$0xff] %v479
      %565 = vst [vmem:[#allocation2 + $0x30] sm:$0xff] %v482
      %566 = vst [vmem:[#allocation2 + $0x38] sm:$0xff] %v485
      %567 = vst [vmem:[#allocation2 + $0x40] sm:$0xff] %v488
      %568 = vst [vmem:[#allocation2 + $0x48] sm:$0xff] %v491
      %569 = vst [vmem:[#allocation2 + $0x50] sm:$0xff] %v494
      %570 = vst [vmem:[#allocation2 + $0x58] sm:$0xff] %v497
      %571 = vst [vmem:[#allocation2 + $0x60] sm:$0xff] %v500
      %572 = vst [vmem:[#allocation2 + $0x68] sm:$0xff] %v503
      %573 = vst [vmem:[#allocation2 + $0x70] sm:$0xff] %v506
      %574 = vst [vmem:[#allocation2 + $0x78] sm:$0xff] %v509
      %575 = vst [vmem:[#allocation2 + $0x80] sm:$0xff] %v512
      %576 = vst [vmem:[#allocation2 + $0x88] sm:$0xff] %v515
      %577 = vst [vmem:[#allocation2 + $0x90] sm:$0xff] %v518
      %578 = vst [vmem:[#allocation2 + $0x98] sm:$0xff] %v521
      %579 = vst [vmem:[#allocation2 + $0xa0] sm:$0xff] %v524
      %580 = vst [vmem:[#allocation2 + $0xa8] sm:$0xff] %v527
      %581 = vst [vmem:[#allocation2 + $0xb0] sm:$0xff] %v530
      %582 = vst [vmem:[#allocation2 + $0xb8] sm:$0xff] %v533
      %583 = vst [vmem:[#allocation2 + $0xc0] sm:$0xff] %v536
      %584 = vst [vmem:[#allocation2 + $0xc8] sm:$0xff] %v539
      %585 = vst [vmem:[#allocation2 + $0xd0] sm:$0xff] %v542
      %586 = vst [vmem:[#allocation2 + $0xd8] sm:$0xff] %v545
      %587 = vst [vmem:[#allocation2 + $0xe0] sm:$0xff] %v548
      %588 = vst [vmem:[#allocation2 + $0xe8] sm:$0xff] %v551
      %589 = vst [vmem:[#allocation2 + $0xf0] sm:$0xff] %v554
      %590 = vst [vmem:[#allocation2 + $0xf8] sm:$0xff] %v557
      %v591 = vld [vmem:[#allocation2] sm:$0xff]
      %v592 = vld [vmem:[#allocation2 + $0x8] sm:$0xff]
      %v593 = vld [vmem:[#allocation2 + $0x10] sm:$0xff]
      %v594 = vld [vmem:[#allocation2 + $0x18] sm:$0xff]
      %v595 = vld [vmem:[#allocation2 + $0x20] sm:$0xff]
      %v596 = vld [vmem:[#allocation2 + $0x28] sm:$0xff]
      %v597 = vld [vmem:[#allocation2 + $0x30] sm:$0xff]
      %v598 = vld [vmem:[#allocation2 + $0x38] sm:$0xff]
      %v599 = vld [vmem:[#allocation2 + $0x40] sm:$0xff]
      %v600 = vld [vmem:[#allocation2 + $0x48] sm:$0xff]
      %v601 = vld [vmem:[#allocation2 + $0x50] sm:$0xff]
      %v602 = vld [vmem:[#allocation2 + $0x58] sm:$0xff]
      %v603 = vld [vmem:[#allocation2 + $0x60] sm:$0xff]
      %v604 = vld [vmem:[#allocation2 + $0x68] sm:$0xff]
      %v605 = vld [vmem:[#allocation2 + $0x70] sm:$0xff]
      %v606 = vld [vmem:[#allocation2 + $0x78] sm:$0xff]
      %v607 = vld [vmem:[#allocation2 + $0x80] sm:$0xff]
      %v608 = vld [vmem:[#allocation2 + $0x88] sm:$0xff]
      %v609 = vld [vmem:[#allocation2 + $0x90] sm:$0xff]
      %v610 = vld [vmem:[#allocation2 + $0x98] sm:$0xff]
      %v611 = vld [vmem:[#allocation2 + $0xa0] sm:$0xff]
      %v612 = vld [vmem:[#allocation2 + $0xa8] sm:$0xff]
      %v613 = vld [vmem:[#allocation2 + $0xb0] sm:$0xff]
      %v614 = vld [vmem:[#allocation2 + $0xb8] sm:$0xff]
      %v615 = vld [vmem:[#allocation2 + $0xc0] sm:$0xff]
      %v616 = vld [vmem:[#allocation2 + $0xc8] sm:$0xff]
      %v617 = vld [vmem:[#allocation2 + $0xd0] sm:$0xff]
      %v618 = vld [vmem:[#allocation2 + $0xd8] sm:$0xff]
      %v619 = vld [vmem:[#allocation2 + $0xe0] sm:$0xff]
      %v620 = vld [vmem:[#allocation2 + $0xe8] sm:$0xff]
      %v621 = vld [vmem:[%s277 + $0x10] sm:$0xff]
      %v622 = vld [vmem:[%s277 + $0x18] sm:$0xff]
      %v623 = vld [vmem:[%s277 + $0x20] sm:$0xff]
      %v624 = vld [vmem:[%s277 + $0x28] sm:$0xff]
      %v625 = vld [vmem:[%s277 + $0x30] sm:$0xff]
      %v626 = vld [vmem:[%s277 + $0x38] sm:$0xff]
      %v627 = vld [vmem:[%s277 + $0x40] sm:$0xff]
      %v628 = vld [vmem:[%s277 + $0x48] sm:$0xff]
      %v629 = vld [vmem:[%s277 + $0x50] sm:$0xff]
      %v630 = vld [vmem:[%s277 + $0x58] sm:$0xff]
      %v631 = vld [vmem:[%s277 + $0x60] sm:$0xff]
      %v632 = vld [vmem:[%s277 + $0x68] sm:$0xff]
      %v633 = vld [vmem:[%s277 + $0x70] sm:$0xff]
      %v634 = vld [vmem:[%s277 + $0x78] sm:$0xff]
      %v635 = vld [vmem:[%s277 + $0x80] sm:$0xff]
      %v636 = vld [vmem:[%s277 + $0x88] sm:$0xff]
      %v637 = vld [vmem:[%s277 + $0x90] sm:$0xff]
      %v638 = vld [vmem:[%s277 + $0x98] sm:$0xff]
      %v639 = vld [vmem:[%s277 + $0xa0] sm:$0xff]
      %v640 = vld [vmem:[%s277 + $0xa8] sm:$0xff]
      %v641 = vld [vmem:[%s277 + $0xb0] sm:$0xff]
      %v642 = vld [vmem:[%s277 + $0xb8] sm:$0xff]
      %v643 = vld [vmem:[%s277 + $0xc0] sm:$0xff]
      %v644 = vld [vmem:[%s277 + $0xc8] sm:$0xff]
      %v645 = vld [vmem:[%s277 + $0xd0] sm:$0xff]
      %v646 = vld [vmem:[%s277 + $0xd8] sm:$0xff]
      %v647 = vld [vmem:[%s277 + $0xe0] sm:$0xff]
      %v648 = vld [vmem:[%s277 + $0xe8] sm:$0xff]
      %v649 = vld [vmem:[%s277 + $0xf0] sm:$0xff]
      %v650 = vld [vmem:[%s277 + $0xf8] sm:$0xff]
      %s651 = scalar_lea.vmem %s2, 16
      %v652 = vld [vmem:[%s651] sm:$0xff]
      %v653 = vld [vmem:[%s651 + $0x8] sm:$0xf]
      %v655 = vsel %vm345, %v621, 0
      %v658 = vsel %vm345, %v622, 0
      %v661 = vsel %vm345, %v623, 0
      %v664 = vsel %vm345, %v624, 0
      %v667 = vsel %vm345, %v625, 0
      %v670 = vsel %vm345, %v626, 0
      %v673 = vsel %vm345, %v627, 0
      %v676 = vsel %vm345, %v628, 0
      %v679 = vsel %vm345, %v629, 0
      %v682 = vsel %vm345, %v630, 0
      %v685 = vsel %vm345, %v631, 0
      %v688 = vsel %vm345, %v632, 0
      %v691 = vsel %vm345, %v633, 0
      %v694 = vsel %vm345, %v634, 0
      %v697 = vsel %vm345, %v635, 0
      %v700 = vsel %vm345, %v636, 0
      %v703 = vsel %vm345, %v637, 0
      %v706 = vsel %vm345, %v638, 0
      %v709 = vsel %vm345, %v639, 0
      %v712 = vsel %vm345, %v640, 0
      %v715 = vsel %vm345, %v641, 0
      %v718 = vsel %vm345, %v642, 0
      %v721 = vsel %vm345, %v643, 0
      %v724 = vsel %vm345, %v644, 0
      %v727 = vsel %vm345, %v645, 0
      %v730 = vsel %vm345, %v646, 0
      %v733 = vsel %vm345, %v647, 0
      %v736 = vsel %vm345, %v648, 0
      %v739 = vsel %vm345, %v649, 0
      %v742 = vsel %vm345, %v650, 0
      %v745 = vsel %vm442, %v653, 0
      %747 = vmatpush.msra.mxu0 0.0
      %748 = vmatpush.msra.mxu0 0.0
      %749 = vmatpush.msra.mxu0 0.0
      %750 = vmatpush.msra.mxu0 0.0
      %751 = vmatpush.msra.mxu0 0.0
      %752 = vmatpush.msra.mxu0 0.0
      %753 = vmatpush.msra.mxu0 0.0
      %754 = vmatpush.msra.mxu0 0.0
      %755 = vmatpush.msra.mxu0 0.0
      %756 = vmatpush.msra.mxu0 0.0
      %757 = vmatpush.msra.mxu0 0.0
      %758 = vmatpush.msra.mxu0 0.0
      %759 = vmatpush.msra.mxu0 0.0
      %760 = vmatpush.msra.mxu0 0.0
      %761 = vmatpush.msra.mxu0 %v745
      %762 = vmatpush.msra.mxu0 %v652
      %763 = vmatmul.f32.gmra.mxu0 %v655
      %v764 = vpop.f32.mrf.mxu0
      %v765 = vadd.f32 0.0, %v764
      %766 = vmatmul.f32.gmra.mxu0 %v658
      %v767 = vpop.f32.mrf.mxu0
      %v768 = vadd.f32 0.0, %v767
      %769 = vmatmul.f32.gmra.mxu0 %v661
      %v770 = vpop.f32.mrf.mxu0
      %v771 = vadd.f32 0.0, %v770
      %772 = vmatmul.f32.gmra.mxu0 %v664
      %v773 = vpop.f32.mrf.mxu0
      %v774 = vadd.f32 0.0, %v773
      %775 = vmatmul.f32.gmra.mxu0 %v667
      %v776 = vpop.f32.mrf.mxu0
      %v777 = vadd.f32 0.0, %v776
      %778 = vmatmul.f32.gmra.mxu0 %v670
      %v779 = vpop.f32.mrf.mxu0
      %v780 = vadd.f32 0.0, %v779
      %781 = vmatmul.f32.gmra.mxu0 %v673
      %v782 = vpop.f32.mrf.mxu0
      %v783 = vadd.f32 0.0, %v782
      %784 = vmatmul.f32.gmra.mxu0 %v676
      %v785 = vpop.f32.mrf.mxu0
      %v786 = vadd.f32 0.0, %v785
      %787 = vmatmul.f32.gmra.mxu0 %v679
      %v788 = vpop.f32.mrf.mxu0
      %v789 = vadd.f32 0.0, %v788
      %790 = vmatmul.f32.gmra.mxu0 %v682
      %v791 = vpop.f32.mrf.mxu0
      %v792 = vadd.f32 0.0, %v791
      %793 = vmatmul.f32.gmra.mxu0 %v685
      %v794 = vpop.f32.mrf.mxu0
      %v795 = vadd.f32 0.0, %v794
      %796 = vmatmul.f32.gmra.mxu0 %v688
      %v797 = vpop.f32.mrf.mxu0
      %v798 = vadd.f32 0.0, %v797
      %799 = vmatmul.f32.gmra.mxu0 %v691
      %v800 = vpop.f32.mrf.mxu0
      %v801 = vadd.f32 0.0, %v800
      %802 = vmatmul.f32.gmra.mxu0 %v694
      %v803 = vpop.f32.mrf.mxu0
      %v804 = vadd.f32 0.0, %v803
      %805 = vmatmul.f32.gmra.mxu0 %v697
      %v806 = vpop.f32.mrf.mxu0
      %v807 = vadd.f32 0.0, %v806
      %808 = vmatmul.f32.gmra.mxu0 %v700
      %v809 = vpop.f32.mrf.mxu0
      %v810 = vadd.f32 0.0, %v809
      %811 = vmatmul.f32.gmra.mxu0 %v703
      %v812 = vpop.f32.mrf.mxu0
      %v813 = vadd.f32 0.0, %v812
      %814 = vmatmul.f32.gmra.mxu0 %v706
      %v815 = vpop.f32.mrf.mxu0
      %v816 = vadd.f32 0.0, %v815
      %817 = vmatmul.f32.gmra.mxu0 %v709
      %v818 = vpop.f32.mrf.mxu0
      %v819 = vadd.f32 0.0, %v818
      %820 = vmatmul.f32.gmra.mxu0 %v712
      %v821 = vpop.f32.mrf.mxu0
      %v822 = vadd.f32 0.0, %v821
      %823 = vmatmul.f32.gmra.mxu0 %v715
      %v824 = vpop.f32.mrf.mxu0
      %v825 = vadd.f32 0.0, %v824
      %826 = vmatmul.f32.gmra.mxu0 %v718
      %v827 = vpop.f32.mrf.mxu0
      %v828 = vadd.f32 0.0, %v827
      %829 = vmatmul.f32.gmra.mxu0 %v721
      %v830 = vpop.f32.mrf.mxu0
      %v831 = vadd.f32 0.0, %v830
      %832 = vmatmul.f32.gmra.mxu0 %v724
      %v833 = vpop.f32.mrf.mxu0
      %v834 = vadd.f32 0.0, %v833
      %835 = vmatmul.f32.gmra.mxu0 %v727
      %v836 = vpop.f32.mrf.mxu0
      %v837 = vadd.f32 0.0, %v836
      %838 = vmatmul.f32.gmra.mxu0 %v730
      %v839 = vpop.f32.mrf.mxu0
      %v840 = vadd.f32 0.0, %v839
      %841 = vmatmul.f32.gmra.mxu0 %v733
      %v842 = vpop.f32.mrf.mxu0
      %v843 = vadd.f32 0.0, %v842
      %844 = vmatmul.f32.gmra.mxu0 %v736
      %v845 = vpop.f32.mrf.mxu0
      %v846 = vadd.f32 0.0, %v845
      %847 = vmatmul.f32.gmra.mxu0 %v739
      %v848 = vpop.f32.mrf.mxu0
      %v849 = vadd.f32 0.0, %v848
      %850 = vmatmul.f32.gmra.mxu0 %v742
      %v851 = vpop.f32.mrf.mxu0
      %v852 = vadd.f32 0.0, %v851
      %853 = vdwg.mxu0
      %v854 = vadd.f32 %v591, %v765
      %v855 = vadd.f32 %v592, %v768
      %v856 = vadd.f32 %v593, %v771
      %v857 = vadd.f32 %v594, %v774
      %v858 = vadd.f32 %v595, %v777
      %v859 = vadd.f32 %v596, %v780
      %v860 = vadd.f32 %v597, %v783
      %v861 = vadd.f32 %v598, %v786
      %v862 = vadd.f32 %v599, %v789
      %v863 = vadd.f32 %v600, %v792
      %v864 = vadd.f32 %v601, %v795
      %v865 = vadd.f32 %v602, %v798
      %v866 = vadd.f32 %v603, %v801
      %v867 = vadd.f32 %v604, %v804
      %v868 = vadd.f32 %v605, %v807
      %v869 = vadd.f32 %v606, %v810
      %v870 = vadd.f32 %v607, %v813
      %v871 = vadd.f32 %v608, %v816
      %v872 = vadd.f32 %v609, %v819
      %v873 = vadd.f32 %v610, %v822
      %v874 = vadd.f32 %v611, %v825
      %v875 = vadd.f32 %v612, %v828
      %v876 = vadd.f32 %v613, %v831
      %v877 = vadd.f32 %v614, %v834
      %v878 = vadd.f32 %v615, %v837
      %v879 = vadd.f32 %v616, %v840
      %v880 = vadd.f32 %v617, %v843
      %v881 = vadd.f32 %v618, %v846
      %v882 = vadd.f32 %v619, %v849
      %v883 = vadd.f32 %v620, %v852
      %884 = vst [vmem:[#allocation2] sm:$0xff] %v854
      %885 = vst [vmem:[#allocation2 + $0x8] sm:$0xff] %v855
      %886 = vst [vmem:[#allocation2 + $0x10] sm:$0xff] %v856
      %887 = vst [vmem:[#allocation2 + $0x18] sm:$0xff] %v857
      %888 = vst [vmem:[#allocation2 + $0x20] sm:$0xff] %v858
      %889 = vst [vmem:[#allocation2 + $0x28] sm:$0xff] %v859
      %890 = vst [vmem:[#allocation2 + $0x30] sm:$0xff] %v860
      %891 = vst [vmem:[#allocation2 + $0x38] sm:$0xff] %v861
      %892 = vst [vmem:[#allocation2 + $0x40] sm:$0xff] %v862
      %893 = vst [vmem:[#allocation2 + $0x48] sm:$0xff] %v863
      %894 = vst [vmem:[#allocation2 + $0x50] sm:$0xff] %v864
      %895 = vst [vmem:[#allocation2 + $0x58] sm:$0xff] %v865
      %896 = vst [vmem:[#allocation2 + $0x60] sm:$0xff] %v866
      %897 = vst [vmem:[#allocation2 + $0x68] sm:$0xff] %v867
      %898 = vst [vmem:[#allocation2 + $0x70] sm:$0xff] %v868
      %899 = vst [vmem:[#allocation2 + $0x78] sm:$0xff] %v869
      %900 = vst [vmem:[#allocation2 + $0x80] sm:$0xff] %v870
      %901 = vst [vmem:[#allocation2 + $0x88] sm:$0xff] %v871
      %902 = vst [vmem:[#allocation2 + $0x90] sm:$0xff] %v872
      %903 = vst [vmem:[#allocation2 + $0x98] sm:$0xff] %v873
      %904 = vst [vmem:[#allocation2 + $0xa0] sm:$0xff] %v874
      %905 = vst [vmem:[#allocation2 + $0xa8] sm:$0xff] %v875
      %906 = vst [vmem:[#allocation2 + $0xb0] sm:$0xff] %v876
      %907 = vst [vmem:[#allocation2 + $0xb8] sm:$0xff] %v877
      %908 = vst [vmem:[#allocation2 + $0xc0] sm:$0xff] %v878
      %909 = vst [vmem:[#allocation2 + $0xc8] sm:$0xff] %v879
      %910 = vst [vmem:[#allocation2 + $0xd0] sm:$0xff] %v880
      %911 = vst [vmem:[#allocation2 + $0xd8] sm:$0xff] %v881
      %912 = vst [vmem:[#allocation2 + $0xe0] sm:$0xff] %v882
      %913 = vst [vmem:[#allocation2 + $0xe8] sm:$0xff] %v883
      %v914 = vld [vmem:[#allocation2 + $0xf0] sm:$0xff]
      %v915 = vld [vmem:[#allocation2 + $0xf8] sm:$0xff]
      %v916 = vld [vmem:[%s293] sm:$0xff]
      %v917 = vld [vmem:[%s293 + $0x8] sm:$0xff]
      %v918 = vld [vmem:[%s651] sm:$0xff]
      %v919 = vld [vmem:[%s651 + $0x8] sm:$0xf]
      %v921 = vsel %vm345, %v916, 0
      %v924 = vsel %vm345, %v917, 0
      %v927 = vsel %vm442, %v919, 0
      %929 = vmatpush.msra.mxu0 0.0
      %930 = vmatpush.msra.mxu0 0.0
      %931 = vmatpush.msra.mxu0 0.0
      %932 = vmatpush.msra.mxu0 0.0
      %933 = vmatpush.msra.mxu0 0.0
      %934 = vmatpush.msra.mxu0 0.0
      %935 = vmatpush.msra.mxu0 0.0
      %936 = vmatpush.msra.mxu0 0.0
      %937 = vmatpush.msra.mxu0 0.0
      %938 = vmatpush.msra.mxu0 0.0
      %939 = vmatpush.msra.mxu0 0.0
      %940 = vmatpush.msra.mxu0 0.0
      %941 = vmatpush.msra.mxu0 0.0
      %942 = vmatpush.msra.mxu0 0.0
      %943 = vmatpush.msra.mxu0 %v927
      %944 = vmatpush.msra.mxu0 %v918
      %945 = vmatmul.f32.gmra.mxu0 %v921
      %v946 = vpop.f32.mrf.mxu0
      %v947 = vadd.f32 0.0, %v946
      %948 = vmatmul.f32.gmra.mxu0 %v924
      %v949 = vpop.f32.mrf.mxu0
      %v950 = vadd.f32 0.0, %v949
      %951 = vdwg.mxu0
      %v952 = vadd.f32 %v914, %v947
      %v953 = vadd.f32 %v915, %v950
      %954 = vst [vmem:[#allocation2 + $0xf0] sm:$0xff] %v952
      %955 = vst [vmem:[#allocation2 + $0xf8] sm:$0xff] %v953
      %v956 = vld [vmem:[#allocation2] sm:$0xff]
      %v957 = vld [vmem:[#allocation2 + $0x8] sm:$0xff]
      %v958 = vld [vmem:[#allocation2 + $0x10] sm:$0xff]
      %v959 = vld [vmem:[#allocation2 + $0x18] sm:$0xff]
      %v960 = vld [vmem:[#allocation2 + $0x20] sm:$0xff]
      %v961 = vld [vmem:[#allocation2 + $0x28] sm:$0xff]
      %v962 = vld [vmem:[#allocation2 + $0x30] sm:$0xff]
      %v963 = vld [vmem:[#allocation2 + $0x38] sm:$0xff]
      %v964 = vld [vmem:[#allocation2 + $0x40] sm:$0xff]
      %v965 = vld [vmem:[#allocation2 + $0x48] sm:$0xff]
      %v966 = vld [vmem:[#allocation2 + $0x50] sm:$0xff]
      %v967 = vld [vmem:[#allocation2 + $0x58] sm:$0xff]
      %v968 = vld [vmem:[#allocation2 + $0x60] sm:$0xff]
      %v969 = vld [vmem:[#allocation2 + $0x68] sm:$0xff]
      %v970 = vld [vmem:[#allocation2 + $0x70] sm:$0xff]
      %v971 = vld [vmem:[#allocation2 + $0x78] sm:$0xff]
      %v972 = vld [vmem:[#allocation2 + $0x80] sm:$0xff]
      %v973 = vld [vmem:[#allocation2 + $0x88] sm:$0xff]
      %v974 = vld [vmem:[#allocation2 + $0x90] sm:$0xff]
      %v975 = vld [vmem:[#allocation2 + $0x98] sm:$0xff]
      %v976 = vld [vmem:[#allocation2 + $0xa0] sm:$0xff]
      %v977 = vld [vmem:[#allocation2 + $0xa8] sm:$0xff]
      %v978 = vld [vmem:[#allocation2 + $0xb0] sm:$0xff]
      %v979 = vld [vmem:[#allocation2 + $0xb8] sm:$0xff]
      %v980 = vld [vmem:[#allocation2 + $0xc0] sm:$0xff]
      %v981 = vld [vmem:[#allocation2 + $0xc8] sm:$0xff]
      %v982 = vld [vmem:[#allocation2 + $0xd0] sm:$0xff]
      %v983 = vld [vmem:[#allocation2 + $0xd8] sm:$0xff]
      %v984 = vld [vmem:[%s277 + $0x20] sm:$0xff]
      %v985 = vld [vmem:[%s277 + $0x28] sm:$0xff]
      %v986 = vld [vmem:[%s277 + $0x30] sm:$0xff]
      %v987 = vld [vmem:[%s277 + $0x38] sm:$0xff]
      %v988 = vld [vmem:[%s277 + $0x40] sm:$0xff]
      %v989 = vld [vmem:[%s277 + $0x48] sm:$0xff]
      %v990 = vld [vmem:[%s277 + $0x50] sm:$0xff]
      %v991 = vld [vmem:[%s277 + $0x58] sm:$0xff]
      %v992 = vld [vmem:[%s277 + $0x60] sm:$0xff]
      %v993 = vld [vmem:[%s277 + $0x68] sm:$0xff]
      %v994 = vld [vmem:[%s277 + $0x70] sm:$0xff]
      %v995 = vld [vmem:[%s277 + $0x78] sm:$0xff]
      %v996 = vld [vmem:[%s277 + $0x80] sm:$0xff]
      %v997 = vld [vmem:[%s277 + $0x88] sm:$0xff]
      %v998 = vld [vmem:[%s277 + $0x90] sm:$0xff]
      %v999 = vld [vmem:[%s277 + $0x98] sm:$0xff]
      %v1000 = vld [vmem:[%s277 + $0xa0] sm:$0xff]
      %v1001 = vld [vmem:[%s277 + $0xa8] sm:$0xff]
      %v1002 = vld [vmem:[%s277 + $0xb0] sm:$0xff]
      %v1003 = vld [vmem:[%s277 + $0xb8] sm:$0xff]
      %v1004 = vld [vmem:[%s277 + $0xc0] sm:$0xff]
      %v1005 = vld [vmem:[%s277 + $0xc8] sm:$0xff]
      %v1006 = vld [vmem:[%s277 + $0xd0] sm:$0xff]
      %v1007 = vld [vmem:[%s277 + $0xd8] sm:$0xff]
      %v1008 = vld [vmem:[%s277 + $0xe0] sm:$0xff]
      %v1009 = vld [vmem:[%s277 + $0xe8] sm:$0xff]
      %v1010 = vld [vmem:[%s277 + $0xf0] sm:$0xff]
      %v1011 = vld [vmem:[%s277 + $0xf8] sm:$0xff]
      %s1012 = scalar_lea.vmem %s2, 32
      %v1013 = vld [vmem:[%s1012] sm:$0xff]
      %v1014 = vld [vmem:[%s1012 + $0x8] sm:$0xf]
      %v1016 = vsel %vm345, %v984, 0
      %v1019 = vsel %vm345, %v985, 0
      %v1022 = vsel %vm345, %v986, 0
      %v1025 = vsel %vm345, %v987, 0
      %v1028 = vsel %vm345, %v988, 0
      %v1031 = vsel %vm345, %v989, 0
      %v1034 = vsel %vm345, %v990, 0
      %v1037 = vsel %vm345, %v991, 0
      %v1040 = vsel %vm345, %v992, 0
      %v1043 = vsel %vm345, %v993, 0
      %v1046 = vsel %vm345, %v994, 0
      %v1049 = vsel %vm345, %v995, 0
      %v1052 = vsel %vm345, %v996, 0
      %v1055 = vsel %vm345, %v997, 0
      %v1058 = vsel %vm345, %v998, 0
      %v1061 = vsel %vm345, %v999, 0
      %v1064 = vsel %vm345, %v1000, 0
      %v1067 = vsel %vm345, %v1001, 0
      %v1070 = vsel %vm345, %v1002, 0
      %v1073 = vsel %vm345, %v1003, 0
      %v1076 = vsel %vm345, %v1004, 0
      %v1079 = vsel %vm345, %v1005, 0
      %v1082 = vsel %vm345, %v1006, 0
      %v1085 = vsel %vm345, %v1007, 0
      %v1088 = vsel %vm345, %v1008, 0
      %v1091 = vsel %vm345, %v1009, 0
      %v1094 = vsel %vm345, %v1010, 0
      %v1097 = vsel %vm345, %v1011, 0
      %v1100 = vsel %vm442, %v1014, 0
      %1102 = vmatpush.msra.mxu0 0.0
      %1103 = vmatpush.msra.mxu0 0.0
      %1104 = vmatpush.msra.mxu0 0.0
      %1105 = vmatpush.msra.mxu0 0.0
      %1106 = vmatpush.msra.mxu0 0.0
      %1107 = vmatpush.msra.mxu0 0.0
      %1108 = vmatpush.msra.mxu0 0.0
      %1109 = vmatpush.msra.mxu0 0.0
      %1110 = vmatpush.msra.mxu0 0.0
      %1111 = vmatpush.msra.mxu0 0.0
      %1112 = vmatpush.msra.mxu0 0.0
      %1113 = vmatpush.msra.mxu0 0.0
      %1114 = vmatpush.msra.mxu0 0.0
      %1115 = vmatpush.msra.mxu0 0.0
      %1116 = vmatpush.msra.mxu0 %v1100
      %1117 = vmatpush.msra.mxu0 %v1013
      %1118 = vmatmul.f32.gmra.mxu0 %v1016
      %v1119 = vpop.f32.mrf.mxu0
      %v1120 = vadd.f32 0.0, %v1119
      %1121 = vmatmul.f32.gmra.mxu0 %v1019
      %v1122 = vpop.f32.mrf.mxu0
      %v1123 = vadd.f32 0.0, %v1122
      %1124 = vmatmul.f32.gmra.mxu0 %v1022
      %v1125 = vpop.f32.mrf.mxu0
      %v1126 = vadd.f32 0.0, %v1125
      %1127 = vmatmul.f32.gmra.mxu0 %v1025
      %v1128 = vpop.f32.mrf.mxu0
      %v1129 = vadd.f32 0.0, %v1128
      %1130 = vmatmul.f32.gmra.mxu0 %v1028
      %v1131 = vpop.f32.mrf.mxu0
      %v1132 = vadd.f32 0.0, %v1131
      %1133 = vmatmul.f32.gmra.mxu0 %v1031
      %v1134 = vpop.f32.mrf.mxu0
      %v1135 = vadd.f32 0.0, %v1134
      %1136 = vmatmul.f32.gmra.mxu0 %v1034
      %v1137 = vpop.f32.mrf.mxu0
      %v1138 = vadd.f32 0.0, %v1137
      %1139 = vmatmul.f32.gmra.mxu0 %v1037
      %v1140 = vpop.f32.mrf.mxu0
      %v1141 = vadd.f32 0.0, %v1140
      %1142 = vmatmul.f32.gmra.mxu0 %v1040
      %v1143 = vpop.f32.mrf.mxu0
      %v1144 = vadd.f32 0.0, %v1143
      %1145 = vmatmul.f32.gmra.mxu0 %v1043
      %v1146 = vpop.f32.mrf.mxu0
      %v1147 = vadd.f32 0.0, %v1146
      %1148 = vmatmul.f32.gmra.mxu0 %v1046
      %v1149 = vpop.f32.mrf.mxu0
      %v1150 = vadd.f32 0.0, %v1149
      %1151 = vmatmul.f32.gmra.mxu0 %v1049
      %v1152 = vpop.f32.mrf.mxu0
      %v1153 = vadd.f32 0.0, %v1152
      %1154 = vmatmul.f32.gmra.mxu0 %v1052
      %v1155 = vpop.f32.mrf.mxu0
      %v1156 = vadd.f32 0.0, %v1155
      %1157 = vmatmul.f32.gmra.mxu0 %v1055
      %v1158 = vpop.f32.mrf.mxu0
      %v1159 = vadd.f32 0.0, %v1158
      %1160 = vmatmul.f32.gmra.mxu0 %v1058
      %v1161 = vpop.f32.mrf.mxu0
      %v1162 = vadd.f32 0.0, %v1161
      %1163 = vmatmul.f32.gmra.mxu0 %v1061
      %v1164 = vpop.f32.mrf.mxu0
      %v1165 = vadd.f32 0.0, %v1164
      %1166 = vmatmul.f32.gmra.mxu0 %v1064
      %v1167 = vpop.f32.mrf.mxu0
      %v1168 = vadd.f32 0.0, %v1167
      %1169 = vmatmul.f32.gmra.mxu0 %v1067
      %v1170 = vpop.f32.mrf.mxu0
      %v1171 = vadd.f32 0.0, %v1170
      %1172 = vmatmul.f32.gmra.mxu0 %v1070
      %v1173 = vpop.f32.mrf.mxu0
      %v1174 = vadd.f32 0.0, %v1173
      %1175 = vmatmul.f32.gmra.mxu0 %v1073
      %v1176 = vpop.f32.mrf.mxu0
      %v1177 = vadd.f32 0.0, %v1176
      %1178 = vmatmul.f32.gmra.mxu0 %v1076
      %v1179 = vpop.f32.mrf.mxu0
      %v1180 = vadd.f32 0.0, %v1179
      %1181 = vmatmul.f32.gmra.mxu0 %v1079
      %v1182 = vpop.f32.mrf.mxu0
      %v1183 = vadd.f32 0.0, %v1182
      %1184 = vmatmul.f32.gmra.mxu0 %v1082
      %v1185 = vpop.f32.mrf.mxu0
      %v1186 = vadd.f32 0.0, %v1185
      %1187 = vmatmul.f32.gmra.mxu0 %v1085
      %v1188 = vpop.f32.mrf.mxu0
      %v1189 = vadd.f32 0.0, %v1188
      %1190 = vmatmul.f32.gmra.mxu0 %v1088
      %v1191 = vpop.f32.mrf.mxu0
      %v1192 = vadd.f32 0.0, %v1191
      %1193 = vmatmul.f32.gmra.mxu0 %v1091
      %v1194 = vpop.f32.mrf.mxu0
      %v1195 = vadd.f32 0.0, %v1194
      %1196 = vmatmul.f32.gmra.mxu0 %v1094
      %v1197 = vpop.f32.mrf.mxu0
      %v1198 = vadd.f32 0.0, %v1197
      %1199 = vmatmul.f32.gmra.mxu0 %v1097
      %v1200 = vpop.f32.mrf.mxu0
      %v1201 = vadd.f32 0.0, %v1200
      %1202 = vdwg.mxu0
      %v1203 = vadd.f32 %v956, %v1120
      %v1204 = vadd.f32 %v957, %v1123
      %v1205 = vadd.f32 %v958, %v1126
      %v1206 = vadd.f32 %v959, %v1129
      %v1207 = vadd.f32 %v960, %v1132
      %v1208 = vadd.f32 %v961, %v1135
      %v1209 = vadd.f32 %v962, %v1138
      %v1210 = vadd.f32 %v963, %v1141
      %v1211 = vadd.f32 %v964, %v1144
      %v1212 = vadd.f32 %v965, %v1147
      %v1213 = vadd.f32 %v966, %v1150
      %v1214 = vadd.f32 %v967, %v1153
      %v1215 = vadd.f32 %v968, %v1156
      %v1216 = vadd.f32 %v969, %v1159
      %v1217 = vadd.f32 %v970, %v1162
      %v1218 = vadd.f32 %v971, %v1165
      %v1219 = vadd.f32 %v972, %v1168
      %v1220 = vadd.f32 %v973, %v1171
      %v1221 = vadd.f32 %v974, %v1174
      %v1222 = vadd.f32 %v975, %v1177
      %v1223 = vadd.f32 %v976, %v1180
      %v1224 = vadd.f32 %v977, %v1183
      %v1225 = vadd.f32 %v978, %v1186
      %v1226 = vadd.f32 %v979, %v1189
      %v1227 = vadd.f32 %v980, %v1192
      %v1228 = vadd.f32 %v981, %v1195
      %v1229 = vadd.f32 %v982, %v1198
      %v1230 = vadd.f32 %v983, %v1201
      %1231 = vst [vmem:[#allocation2] sm:$0xff] %v1203
      %1232 = vst [vmem:[#allocation2 + $0x8] sm:$0xff] %v1204
      %1233 = vst [vmem:[#allocation2 + $0x10] sm:$0xff] %v1205
      %1234 = vst [vmem:[#allocation2 + $0x18] sm:$0xff] %v1206
      %1235 = vst [vmem:[#allocation2 + $0x20] sm:$0xff] %v1207
      %1236 = vst [vmem:[#allocation2 + $0x28] sm:$0xff] %v1208
      %1237 = vst [vmem:[#allocation2 + $0x30] sm:$0xff] %v1209
      %1238 = vst [vmem:[#allocation2 + $0x38] sm:$0xff] %v1210
      %1239 = vst [vmem:[#allocation2 + $0x40] sm:$0xff] %v1211
      %1240 = vst [vmem:[#allocation2 + $0x48] sm:$0xff] %v1212
      %1241 = vst [vmem:[#allocation2 + $0x50] sm:$0xff] %v1213
      %1242 = vst [vmem:[#allocation2 + $0x58] sm:$0xff] %v1214
      %1243 = vst [vmem:[#allocation2 + $0x60] sm:$0xff] %v1215
      %1244 = vst [vmem:[#allocation2 + $0x68] sm:$0xff] %v1216
      %1245 = vst [vmem:[#allocation2 + $0x70] sm:$0xff] %v1217
      %1246 = vst [vmem:[#allocation2 + $0x78] sm:$0xff] %v1218
      %1247 = vst [vmem:[#allocation2 + $0x80] sm:$0xff] %v1219
      %1248 = vst [vmem:[#allocation2 + $0x88] sm:$0xff] %v1220
      %1249 = vst [vmem:[#allocation2 + $0x90] sm:$0xff] %v1221
      %1250 = vst [vmem:[#allocation2 + $0x98] sm:$0xff] %v1222
      %1251 = vst [vmem:[#allocation2 + $0xa0] sm:$0xff] %v1223
      %1252 = vst [vmem:[#allocation2 + $0xa8] sm:$0xff] %v1224
      %1253 = vst [vmem:[#allocation2 + $0xb0] sm:$0xff] %v1225
      %1254 = vst [vmem:[#allocation2 + $0xb8] sm:$0xff] %v1226
      %1255 = vst [vmem:[#allocation2 + $0xc0] sm:$0xff] %v1227
      %1256 = vst [vmem:[#allocation2 + $0xc8] sm:$0xff] %v1228
      %1257 = vst [vmem:[#allocation2 + $0xd0] sm:$0xff] %v1229
      %1258 = vst [vmem:[#allocation2 + $0xd8] sm:$0xff] %v1230
      %v1259 = vld [vmem:[#allocation2 + $0xe0] sm:$0xff]
      %v1260 = vld [vmem:[#allocation2 + $0xe8] sm:$0xff]
      %v1261 = vld [vmem:[#allocation2 + $0xf0] sm:$0xff]
      %v1262 = vld [vmem:[#allocation2 + $0xf8] sm:$0xff]
      %v1263 = vld [vmem:[%s293] sm:$0xff]
      %v1264 = vld [vmem:[%s293 + $0x8] sm:$0xff]
      %v1265 = vld [vmem:[%s293 + $0x10] sm:$0xff]
      %v1266 = vld [vmem:[%s293 + $0x18] sm:$0xff]
      %v1267 = vld [vmem:[%s1012] sm:$0xff]
      %v1268 = vld [vmem:[%s1012 + $0x8] sm:$0xf]
      %v1270 = vsel %vm345, %v1263, 0
      %v1273 = vsel %vm345, %v1264, 0
      %v1276 = vsel %vm345, %v1265, 0
      %v1279 = vsel %vm345, %v1266, 0
      %v1282 = vsel %vm442, %v1268, 0
      %1284 = vmatpush.msra.mxu0 0.0
      %1285 = vmatpush.msra.mxu0 0.0
      %1286 = vmatpush.msra.mxu0 0.0
      %1287 = vmatpush.msra.mxu0 0.0
      %1288 = vmatpush.msra.mxu0 0.0
      %1289 = vmatpush.msra.mxu0 0.0
      %1290 = vmatpush.msra.mxu0 0.0
      %1291 = vmatpush.msra.mxu0 0.0
      %1292 = vmatpush.msra.mxu0 0.0
      %1293 = vmatpush.msra.mxu0 0.0
      %1294 = vmatpush.msra.mxu0 0.0
      %1295 = vmatpush.msra.mxu0 0.0
      %1296 = vmatpush.msra.mxu0 0.0
      %1297 = vmatpush.msra.mxu0 0.0
      %1298 = vmatpush.msra.mxu0 %v1282
      %1299 = vmatpush.msra.mxu0 %v1267
      %1300 = vmatmul.f32.gmra.mxu0 %v1270
      %v1301 = vpop.f32.mrf.mxu0
      %v1302 = vadd.f32 0.0, %v1301
      %1303 = vmatmul.f32.gmra.mxu0 %v1273
      %v1304 = vpop.f32.mrf.mxu0
      %v1305 = vadd.f32 0.0, %v1304
      %1306 = vmatmul.f32.gmra.mxu0 %v1276
      %v1307 = vpop.f32.mrf.mxu0
      %v1308 = vadd.f32 0.0, %v1307
      %1309 = vmatmul.f32.gmra.mxu0 %v1279
      %v1310 = vpop.f32.mrf.mxu0
      %v1311 = vadd.f32 0.0, %v1310
      %1312 = vdwg.mxu0
      %v1313 = vadd.f32 %v1259, %v1302
      %v1314 = vadd.f32 %v1260, %v1305
      %v1315 = vadd.f32 %v1261, %v1308
      %v1316 = vadd.f32 %v1262, %v1311
      %1317 = vst [vmem:[#allocation2 + $0xe0] sm:$0xff] %v1313
      %1318 = vst [vmem:[#allocation2 + $0xe8] sm:$0xff] %v1314
      %1319 = vst [vmem:[#allocation2 + $0xf0] sm:$0xff] %v1315
      %1320 = vst [vmem:[#allocation2 + $0xf8] sm:$0xff] %v1316
      %v1321 = vld [vmem:[#allocation2] sm:$0xff]
      %v1322 = vld [vmem:[#allocation2 + $0x8] sm:$0xff]
      %v1323 = vld [vmem:[#allocation2 + $0x10] sm:$0xff]
      %v1324 = vld [vmem:[#allocation2 + $0x18] sm:$0xff]
      %v1325 = vld [vmem:[#allocation2 + $0x20] sm:$0xff]
      %v1326 = vld [vmem:[#allocation2 + $0x28] sm:$0xff]
      %v1327 = vld [vmem:[#allocation2 + $0x30] sm:$0xff]
      %v1328 = vld [vmem:[#allocation2 + $0x38] sm:$0xff]
      %v1329 = vld [vmem:[#allocation2 + $0x40] sm:$0xff]
      %v1330 = vld [vmem:[#allocation2 + $0x48] sm:$0xff]
      %v1331 = vld [vmem:[#allocation2 + $0x50] sm:$0xff]
      %v1332 = vld [vmem:[#allocation2 + $0x58] sm:$0xff]
      %v1333 = vld [vmem:[#allocation2 + $0x60] sm:$0xff]
      %v1334 = vld [vmem:[#allocation2 + $0x68] sm:$0xff]
      %v1335 = vld [vmem:[#allocation2 + $0x70] sm:$0xff]
      %v1336 = vld [vmem:[#allocation2 + $0x78] sm:$0xff]
      %v1337 = vld [vmem:[#allocation2 + $0x80] sm:$0xff]
      %v1338 = vld [vmem:[#allocation2 + $0x88] sm:$0xff]
      %v1339 = vld [vmem:[#allocation2 + $0x90] sm:$0xff]
      %v1340 = vld [vmem:[#allocation2 + $0x98] sm:$0xff]
      %v1341 = vld [vmem:[#allocation2 + $0xa0] sm:$0xff]
      %v1342 = vld [vmem:[#allocation2 + $0xa8] sm:$0xff]
      %v1343 = vld [vmem:[#allocation2 + $0xb0] sm:$0xff]
      %v1344 = vld [vmem:[#allocation2 + $0xb8] sm:$0xff]
      %v1345 = vld [vmem:[#allocation2 + $0xc0] sm:$0xff]
      %v1346 = vld [vmem:[#allocation2 + $0xc8] sm:$0xff]
      %v1347 = vld [vmem:[#allocation2 + $0xd0] sm:$0xff]
      %v1348 = vld [vmem:[#allocation2 + $0xd8] sm:$0xff]
      %v1349 = vld [vmem:[#allocation2 + $0xe0] sm:$0xff]
      %v1350 = vld [vmem:[#allocation2 + $0xe8] sm:$0xff]
      %v1351 = vld [vmem:[#allocation2 + $0xf0] sm:$0xff]
      %v1352 = vld [vmem:[#allocation2 + $0xf8] sm:$0xff]
      %v1353 = vmax.f32 %v1321, 0.0
      %v1354 = vmax.f32 %v1322, 0.0
      %v1355 = vmax.f32 %v1323, 0.0
      %v1356 = vmax.f32 %v1324, 0.0
      %v1357 = vmax.f32 %v1325, 0.0
      %v1358 = vmax.f32 %v1326, 0.0
      %v1359 = vmax.f32 %v1327, 0.0
      %v1360 = vmax.f32 %v1328, 0.0
      %v1361 = vmax.f32 %v1329, 0.0
      %v1362 = vmax.f32 %v1330, 0.0
      %v1363 = vmax.f32 %v1331, 0.0
      %v1364 = vmax.f32 %v1332, 0.0
      %v1365 = vmax.f32 %v1333, 0.0
      %v1366 = vmax.f32 %v1334, 0.0
      %v1367 = vmax.f32 %v1335, 0.0
      %v1368 = vmax.f32 %v1336, 0.0
      %v1369 = vmax.f32 %v1337, 0.0
      %v1370 = vmax.f32 %v1338, 0.0
      %v1371 = vmax.f32 %v1339, 0.0
      %v1372 = vmax.f32 %v1340, 0.0
      %v1373 = vmax.f32 %v1341, 0.0
      %v1374 = vmax.f32 %v1342, 0.0
      %v1375 = vmax.f32 %v1343, 0.0
      %v1376 = vmax.f32 %v1344, 0.0
      %v1377 = vmax.f32 %v1345, 0.0
      %v1378 = vmax.f32 %v1346, 0.0
      %v1379 = vmax.f32 %v1347, 0.0
      %v1380 = vmax.f32 %v1348, 0.0
      %v1381 = vmax.f32 %v1349, 0.0
      %v1382 = vmax.f32 %v1350, 0.0
      %v1383 = vmax.f32 %v1351, 0.0
      %v1384 = vmax.f32 %v1352, 0.0
      %1385 = vst [vmem:[%s305] sm:$0xff] %v1353
      %1386 = vst [vmem:[%s305 + $0x8] sm:$0xff] %v1354
      %1387 = vst [vmem:[%s305 + $0x10] sm:$0xff] %v1355
      %1388 = vst [vmem:[%s305 + $0x18] sm:$0xff] %v1356
      %1389 = vst [vmem:[%s305 + $0x20] sm:$0xff] %v1357
      %1390 = vst [vmem:[%s305 + $0x28] sm:$0xff] %v1358
      %1391 = vst [vmem:[%s305 + $0x30] sm:$0xff] %v1359
      %1392 = vst [vmem:[%s305 + $0x38] sm:$0xff] %v1360
      %1393 = vst [vmem:[%s305 + $0x40] sm:$0xff] %v1361
      %1394 = vst [vmem:[%s305 + $0x48] sm:$0xff] %v1362
      %1395 = vst [vmem:[%s305 + $0x50] sm:$0xff] %v1363
      %1396 = vst [vmem:[%s305 + $0x58] sm:$0xff] %v1364
      %1397 = vst [vmem:[%s305 + $0x60] sm:$0xff] %v1365
      %1398 = vst [vmem:[%s305 + $0x68] sm:$0xff] %v1366
      %1399 = vst [vmem:[%s305 + $0x70] sm:$0xff] %v1367
      %1400 = vst [vmem:[%s305 + $0x78] sm:$0xff] %v1368
      %1401 = vst [vmem:[%s305 + $0x80] sm:$0xff] %v1369
      %1402 = vst [vmem:[%s305 + $0x88] sm:$0xff] %v1370
      %1403 = vst [vmem:[%s305 + $0x90] sm:$0xff] %v1371
      %1404 = vst [vmem:[%s305 + $0x98] sm:$0xff] %v1372
      %1405 = vst [vmem:[%s305 + $0xa0] sm:$0xff] %v1373
      %1406 = vst [vmem:[%s305 + $0xa8] sm:$0xff] %v1374
      %1407 = vst [vmem:[%s305 + $0xb0] sm:$0xff] %v1375
      %1408 = vst [vmem:[%s305 + $0xb8] sm:$0xff] %v1376
      %1409 = vst [vmem:[%s305 + $0xc0] sm:$0xff] %v1377
      %1410 = vst [vmem:[%s305 + $0xc8] sm:$0xff] %v1378
      %1411 = vst [vmem:[%s305 + $0xd0] sm:$0xff] %v1379
      %1412 = vst [vmem:[%s305 + $0xd8] sm:$0xff] %v1380
      %1413 = vst [vmem:[%s305 + $0xe0] sm:$0xff] %v1381
      %1414 = vst [vmem:[%s305 + $0xe8] sm:$0xff] %v1382
      %1415 = vst [vmem:[%s305 + $0xf0] sm:$0xff] %v1383
      %1416 = vst [vmem:[%s305 + $0xf8] sm:$0xff] %v1384
      %s1417 = smul.u32 32, %s20
      %p1418 = scmp.lt.s32.totalorder %s19, 1
      %s1419 = scalar_select %p1418, %s19, 1
      %p1420 = scmp.lt.s32.totalorder %s1417, 31
      %s1421 = scalar_select %p1420, %s1417, 31
      %s1422 = smul.addr %s1419, 32
      %s1423 = sadd.s32 %s1421, %s1422
      %s1424 = smul.addr %s1423, 8
      %s1425 = scalar_lea.vmem %s4, %s1424
      // Predicated region
      $region37: #{conv_layer_forward.1} parent=35 // pred_check
        %p1426 = pneg %p149
      $region38: #{conv_layer_forward.1} parent=35 // pred_check_branch
        %1428 = sbr.rel (%p1426) target = $region40
      $region39: #{conv_layer_forward.1} parent=35 // pred_region
        %s1429 = smul.u32 32, %s20
      $region40: #{conv_layer_forward.1} parent=35 // pred_fallthru
        _
    $region36: #{conv_layer_forward.1} parent=5 // pred_fallthru
      _
    %p1430 = scmp.le.s32.totalorder 2, %s10
    // Predicated region
    $region41: #{conv_layer_forward.1} parent=5 // pred_check
      %p1431 = pneg %p1430
    $region42: #{conv_layer_forward.1} parent=5 // pred_check_branch
      %1433 = sbr.rel (%p1431) target = $region44
    $region43: #{conv_layer_forward.1} parent=5 // pred_region
      %s1434 = ssub.s32 %s10, 2
      // Predicated region
      $region45: #{conv_layer_forward.1} parent=43 // pred_check
        %p1435 = pneg %p155
      $region46: #{conv_layer_forward.1} parent=43 // pred_check_branch
        %1437 = sbr.rel (%p1435) target = $region48
      $region47: #{conv_layer_forward.1} parent=43 // pred_region
        %s1438 = smul.u32 32, %s22
        %p1439 = scmp.lt.s32.totalorder %s21, 1
        %s1440 = scalar_select %p1439, %s21, 1
        %p1441 = scmp.lt.s32.totalorder %s1438, 31
        %s1442 = scalar_select %p1441, %s1438, 31
        %s1443 = smul.addr %s1440, 32
        %s1444 = sadd.s32 %s1442, %s1443
        %s1445 = smul.addr %s1444, 8
        %s1446 = scalar_lea.vmem %s4, %s1445
      $region48: #{conv_layer_forward.1} parent=43 // pred_fallthru
        _
    $region44: #{conv_layer_forward.1} parent=5 // pred_fallthru
      _
  $region6: #{conv_layer_forward.1} parent=0 // loop_footer
    %s14 = sadd.s32 1, %s10
  $region7: #{conv_layer_forward.1} parent=0 // loop_footer_branch
    %9 = sbr.rel target = $region3
  $region8: #{conv_layer_forward.1} parent=0 // loop_exit
    _

</llo_original>
